<compile_context>
chip_gen: v7x
topology: tpu7x:2x2x1
jax: 0.10.0
libtpu: 0.0.40
codegen_flags: <defaults>
</compile_context>

<pallas_src>
import functools

import jax
import jax.numpy as jnp
from jax import lax
from jax.experimental import pallas as pl
from jax.experimental.pallas import tpu as pltpu

NG_SUBLANE = 8      # sublane tile (minimum batch rows per group)
LANE = 128          # lane tile
MAX_NG_DEFAULT = 256


# ----------------------------------------------------------------------------
# Pallas kernel: one (batch-group, time-chunk) grid step.
# ----------------------------------------------------------------------------
def _sep_block_kernel(
    x_ref,       # [1, TC, NG, Ip]   input chunk (time-major inside the chunk)
    h0_ref,      # [2, 1, NG, Hp]    initial hidden states for this group
    wi1_ref,     # [Ip, 3Hp]         layer-1 input weights  (r|z|n, gate-aligned)
    wh1_ref,     # [Hp, 3Hp]         layer-1 hidden weights
    b1_ref,      # [1, 3Hp]          layer-1 combined bias (r,z: bi+bh ; n: bi only)
    bh1n_ref,    # [1, Hp]           layer-1 hidden bias of the n gate
    wi2_ref,     # [Hp, 3Hp]
    wh2_ref,     # [Hp, 3Hp]
    b2_ref,      # [1, 3Hp]
    bh2n_ref,    # [1, Hp]
    wd_ref,      # [Hp, Ip]          dense weight (transposed)
    bd_ref,      # [1, Ip]           dense bias
    mask_ref,    # out: [1, TC, NG, Ip]
    states_ref,  # out: [2, 1, NG, Hp]
    gi1_s,       # scratch: [TC, NG, 3Hp]  hoisted layer-1 input projection
    h2buf_s,     # scratch: [TC, NG, Hp]   per-chunk layer-2 outputs
    hcarry_s,    # scratch: [2, NG, Hp]    recurrent state carried across chunks
    *, seq_len, chunk, unroll,
):
    c = pl.program_id(1)                       # time-chunk index
    last_c = pl.num_programs(1) - 1
    TC, NG, Ip = x_ref.shape[1], x_ref.shape[2], x_ref.shape[3]
    Hp = wh1_ref.shape[0]

    # ---- (re)initialize the recurrent state at the first chunk of a group ----
    @pl.when(c == 0)
    def _():
        hcarry_s[...] = h0_ref[...].reshape(2, NG, Hp)

    # ---- hoisted, chunk-batched layer-1 input projection (one big matmul) ----
    x2d = x_ref[0].reshape(TC * NG, Ip)
    gi1 = jnp.dot(x2d, wi1_ref[...], preferred_element_type=jnp.float32) + b1_ref[...]
    gi1_s[...] = gi1.reshape(TC, NG, 3 * Hp)

    # Hoisted weight loads / bias broadcasts (kept out of the serial loop).
    wh1 = wh1_ref[...]
    wi2 = wi2_ref[...]
    wh2 = wh2_ref[...]
    b2 = jnp.broadcast_to(b2_ref[...], (NG, 3 * Hp))
    bh1n = jnp.broadcast_to(bh1n_ref[...], (NG, Hp))
    bh2n = jnp.broadcast_to(bh2n_ref[...], (NG, Hp))

    def step(t, carry):
        h1, h2 = carry

        # ---- layer 1 GRU cell (input projection already in gi1_s) ----
        gi1_t = gi1_s[t]                                           # [NG, 3Hp]
        gh1 = jnp.dot(h1, wh1, preferred_element_type=jnp.float32)
        rz1 = jax.nn.sigmoid(gi1_t[:, :2 * Hp] + gh1[:, :2 * Hp])  # fused r|z
        r1 = rz1[:, :Hp]
        z1 = rz1[:, Hp:]
        n1 = jnp.tanh(gi1_t[:, 2 * Hp:] + r1 * (gh1[:, 2 * Hp:] + bh1n))
        h1n = (1.0 - z1) * n1 + z1 * h1

        # ---- layer 2 GRU cell ----
        gi2 = jnp.dot(h1n, wi2, preferred_element_type=jnp.float32) + b2
        gh2 = jnp.dot(h2, wh2, preferred_element_type=jnp.float32)
        rz2 = jax.nn.sigmoid(gi2[:, :2 * Hp] + gh2[:, :2 * Hp])
        r2 = rz2[:, :Hp]
        z2 = rz2[:, Hp:]
        n2 = jnp.tanh(gi2[:, 2 * Hp:] + r2 * (gh2[:, 2 * Hp:] + bh2n))
        h2n = (1.0 - z2) * n2 + z2 * h2

        h2buf_s[t] = h2n
        return (h1n, h2n)

    carry0 = (hcarry_s[0], hcarry_s[1])
    if seq_len % chunk == 0:
        # All chunks are full: static trip count, unrolled scan.
        h1_f, h2_f = lax.fori_loop(0, TC, step, carry0, unroll=unroll)
    else:
        # Ragged tail: per-chunk dynamic trip count (no per-step select guard).
        trip = jnp.minimum(chunk, seq_len - c * chunk)
        h1_f, h2_f = lax.fori_loop(0, trip, step, carry0)

    # Carry state to the next chunk; emit out_states only on the last chunk.
    @pl.when(c != last_c)
    def _():
        hcarry_s[0] = h1_f
        hcarry_s[1] = h2_f

    @pl.when(c == last_c)
    def _():
        states_ref[0, 0] = h1_f
        states_ref[1, 0] = h2_f

    # ---- hoisted dense + sigmoid mask head for the whole chunk ----
    h2_flat = h2buf_s[...].reshape(TC * NG, Hp)
    logits = jnp.dot(h2_flat, wd_ref[...], preferred_element_type=jnp.float32) + bd_ref[...]
    mask_ref[0] = jax.nn.sigmoid(logits).reshape(TC, NG, Ip)


# ----------------------------------------------------------------------------
# Static configuration helpers (plain Python on shapes).
# ----------------------------------------------------------------------------
def _round_up(v, m):
    return (v + m - 1) // m * m


def _cdiv(a, b):
    return -(-a // b)


def _default_num_groups(batch):
    """2 parallel batch groups only on chips with >1 TensorCore per device."""
    if batch <= NG_SUBLANE:
        return 1
    try:
        kind = jax.devices()[0].device_kind.lower()
    except Exception:
        kind = ""
    multi_tc = ("v4" in kind) or ("v5p" in kind) or ("7" in kind)
    return 2 if multi_tc else 1


def _batch_layout(n, num_groups, max_ng):
    g = max(1, int(num_groups))
    ng = min(max_ng, _round_up(max(1, _cdiv(n, g)), NG_SUBLANE))
    g = _cdiv(n, ng)                       # actual group count after clamping
    ng = min(max_ng, _round_up(_cdiv(n, g), NG_SUBLANE))
    return g, ng, g * ng                   # (G, NG, padded batch)


def _pick_chunk(seq_len, ng, ip, hp, chunk_t):
    """Largest time chunk that keeps pipelined VMEM use well under 64 MiB."""
    budget = 36 * 1024 * 1024
    weights = 8 * (ip * 3 * hp + 3 * hp * 3 * hp + hp * ip)   # double-buffered
    per_t = 4 * ng * (4 * ip + 4 * hp)     # x+mask (x2 bufs) + gi1_s + h2buf
    tc_cap = max(8, (budget - weights) // per_t)
    return int(max(1, min(chunk_t, tc_cap, seq_len)))


# ----------------------------------------------------------------------------
# Gate-aligned parameter packing (each gate padded to its own 128-lane segment).
# ----------------------------------------------------------------------------
def _pack_gate_weight(w, in_dim, h, in_pad, hp):
    out = jnp.zeros((in_pad, 3 * hp), jnp.float32)
    for g in range(3):
        out = out.at[:in_dim, g * hp:g * hp + h].set(w[:, g * h:(g + 1) * h])
    return out


def _pack_gate_bias(b, h, hp):
    out = jnp.zeros((1, 3 * hp), jnp.float32)
    for g in range(3):
        out = out.at[:, g * hp:g * hp + h].set(b[:, g * h:(g + 1) * h])
    return out


# ----------------------------------------------------------------------------
# Wrapper: padding, packing, layout, pallas_call.
# ----------------------------------------------------------------------------
def seperation_block_stateful(x, in_states, params, *, chunk_t=256,
                              num_groups=None, max_ng=MAX_NG_DEFAULT):
    """x: [N, T, I] float32, in_states: [2, N, H] float32.

    Returns (mask [N, T, I], out_states [2, N, H]) — matches the PyTorch module.
    """
    if num_groups is None:
        num_groups = _default_num_groups(int(x.shape[0]))
    return _sep_impl(x, in_states, params, chunk_t=int(chunk_t),
                     num_groups=int(num_groups), max_ng=int(max_ng))


@functools.partial(jax.jit, static_argnames=("chunk_t", "num_groups", "max_ng"))
def _sep_impl(x, in_states, params, *, chunk_t, num_groups, max_ng):
    N, T, I = x.shape
    H = in_states.shape[-1]

    G, NG, Np = _batch_layout(N, num_groups, max_ng)
    Ip = _round_up(I, LANE)
    Hp = _round_up(H, LANE)
    TC = _pick_chunk(T, NG, Ip, Hp, chunk_t)
    Tp = _round_up(T, TC)
    n_chunks = Tp // TC
    unroll = 4 if NG <= 16 else 2          # small-M: hide latency; big-M: no spill

    # ---- gate-aligned, zero-padded parameters ----
    wi1 = _pack_gate_weight(params["wi1"], I, H, Ip, Hp)
    wh1 = _pack_gate_weight(params["wh1"], H, H, Hp, Hp)
    wi2 = _pack_gate_weight(params["wi2"], H, H, Hp, Hp)
    wh2 = _pack_gate_weight(params["wh2"], H, H, Hp, Hp)

    bi1 = _pack_gate_bias(params["bi1"], H, Hp)
    bh1 = _pack_gate_bias(params["bh1"], H, Hp)
    bi2 = _pack_gate_bias(params["bi2"], H, Hp)
    bh2 = _pack_gate_bias(params["bh2"], H, Hp)
    # Fold r/z hidden biases into the hoisted input-projection bias; the n-gate
    # hidden bias stays separate because of r * (Whn h + bhn).
    b1 = bi1 + bh1.at[:, 2 * Hp:].set(0.0)
    b2 = bi2 + bh2.at[:, 2 * Hp:].set(0.0)
    bh1n = bh1[:, 2 * Hp:]
    bh2n = bh2[:, 2 * Hp:]

    wd = jnp.zeros((Hp, Ip), jnp.float32).at[:H, :I].set(params["wd"])
    bd = jnp.zeros((1, Ip), jnp.float32).at[:, :I].set(params["bd"])

    # ---- pad & lay out activations: [G, Tp, NG, Ip] (sublane = batch) ----
    # TODO(synk): this (and the inverse mask transpose below) is an extra HBM
    # pass over x/mask; acceptable here since the kernel is recurrence-bound.
    xp = jnp.zeros((Np, Tp, Ip), jnp.float32).at[:N, :T, :I].set(x)
    xp = xp.reshape(G, NG, Tp, Ip).transpose(0, 2, 1, 3)

    h0 = jnp.zeros((2, Np, Hp), jnp.float32).at[:, :N, :H].set(in_states)
    h0 = h0.reshape(2, G, NG, Hp)

    kernel = functools.partial(_sep_block_kernel, seq_len=T, chunk=TC, unroll=unroll)

    grid_spec = pltpu.PrefetchScalarGridSpec(
        num_scalar_prefetch=0,
        grid=(G, n_chunks),
        in_specs=[
            pl.BlockSpec((1, TC, NG, Ip), lambda g, c: (g, c, 0, 0)),   # x chunk
            pl.BlockSpec((2, 1, NG, Hp), lambda g, c: (0, g, 0, 0)),    # h0 group
            pl.BlockSpec((Ip, 3 * Hp), lambda g, c: (0, 0)),            # wi1
            pl.BlockSpec((Hp, 3 * Hp), lambda g, c: (0, 0)),            # wh1
            pl.BlockSpec((1, 3 * Hp), lambda g, c: (0, 0)),             # b1
            pl.BlockSpec((1, Hp), lambda g, c: (0, 0)),                 # bh1n
            pl.BlockSpec((Hp, 3 * Hp), lambda g, c: (0, 0)),            # wi2
            pl.BlockSpec((Hp, 3 * Hp), lambda g, c: (0, 0)),            # wh2
            pl.BlockSpec((1, 3 * Hp), lambda g, c: (0, 0)),             # b2
            pl.BlockSpec((1, Hp), lambda g, c: (0, 0)),                 # bh2n
            pl.BlockSpec((Hp, Ip), lambda g, c: (0, 0)),                # wd
            pl.BlockSpec((1, Ip), lambda g, c: (0, 0)),                 # bd
        ],
        out_specs=[
            pl.BlockSpec((1, TC, NG, Ip), lambda g, c: (g, c, 0, 0)),   # mask chunk
            pl.BlockSpec((2, 1, NG, Hp), lambda g, c: (0, g, 0, 0)),    # out states
        ],
        scratch_shapes=[
            pltpu.VMEM((TC, NG, 3 * Hp), jnp.float32),  # hoisted input projection
            pltpu.VMEM((TC, NG, Hp), jnp.float32),      # per-chunk h2 buffer
            pltpu.VMEM((2, NG, Hp), jnp.float32),       # recurrent state carry
        ],
    )

    mask_p, states_p = pl.pallas_call(
        kernel,
        out_shape=(
            jax.ShapeDtypeStruct((G, Tp, NG, Ip), jnp.float32),
            jax.ShapeDtypeStruct((2, G, NG, Hp), jnp.float32),
        ),
        grid_spec=grid_spec,
        compiler_params=pltpu.CompilerParams(
            # batch groups independent (megacore on v7x / v4); time sequential.
            dimension_semantics=("parallel", "arbitrary"),
            vmem_limit_bytes=64 * 1024 * 1024,
        ),
    )(xp, h0, wi1, wh1, b1, bh1n, wi2, wh2, b2, bh2n, wd, bd)

    mask = mask_p.transpose(0, 2, 1, 3).reshape(Np, Tp, Ip)[:N, :T, :I]
    out_states = states_p.reshape(2, Np, Hp)[:, :N, :H]
    return mask, out_states


# ----------------------------------------------------------------------------
# Deterministic parameter construction (PyTorch-style uniform init).
# ----------------------------------------------------------------------------
def make_params(key, input_size, hidden_size):
    k = 1.0 / jnp.sqrt(hidden_size)
    keys = jax.random.split(key, 10)

    def unif(kk, shape):
        return jax.random.uniform(kk, shape, jnp.float32, minval=-k, maxval=k)

    H3 = 3 * hidden_size
    return {
        # layer 1 (input_size -> hidden_size), stored transposed: [in, 3H] (r|z|n)
        "wi1": unif(keys[0], (input_size, H3)),
        "wh1": unif(keys[1], (hidden_size, H3)),
        "bi1": unif(keys[2], (1, H3)),
        "bh1": unif(keys[3], (1, H3)),
        # layer 2 (hidden_size -> hidden_size)
        "wi2": unif(keys[4], (hidden_size, H3)),
        "wh2": unif(keys[5], (hidden_size, H3)),
        "bi2": unif(keys[6], (1, H3)),
        "bh2": unif(keys[7], (1, H3)),
        # dense: nn.Linear(hidden_size, input_size), stored transposed: [H, I]
        "wd": unif(keys[8], (hidden_size, input_size)),
        "bd": unif(keys[9], (1, input_size)),
    }


# ----------------------------------------------------------------------------
# Pure-JAX reference for validation.
# ----------------------------------------------------------------------------
def _gru_ref(x, h0, wi, wh, bi, bh):
    H = h0.shape[-1]

    def step(h, x_t):
        gi = x_t @ wi + bi
        gh = h @ wh + bh
        r = jax.nn.sigmoid(gi[:, :H] + gh[:, :H])
        z = jax.nn.sigmoid(gi[:, H:2 * H] + gh[:, H:2 * H])
        n = jnp.tanh(gi[:, 2 * H:] + r * gh[:, 2 * H:])
        h_new = (1.0 - z) * n + z * h
        return h_new, h_new

    hT, ys = lax.scan(step, h0, jnp.transpose(x, (1, 0, 2)))
    return jnp.transpose(ys, (1, 0, 2)), hT


def reference(x, in_states, p):
    x1, h1 = _gru_ref(x, in_states[0], p["wi1"], p["wh1"], p["bi1"], p["bh1"])
    x2, h2 = _gru_ref(x1, in_states[1], p["wi2"], p["wh2"], p["bi2"], p["bh2"])
    mask = jax.nn.sigmoid(x2 @ p["wd"] + p["bd"])
    return mask, jnp.stack([h1, h2])


if __name__ == "__main__":
    INPUT_SIZE, HIDDEN_SIZE = 64, 32

    root = jax.random.PRNGKey(0)
    k_p, k_rest = jax.random.split(root)
    params = make_params(k_p, INPUT_SIZE, HIDDEN_SIZE)

    def run_case(key, batch, seq, **kw):
        kx, ks = jax.random.split(key)
        x = jax.random.normal(kx, (batch, seq, INPUT_SIZE), jnp.float32)
        st = jax.random.normal(ks, (2, batch, HIDDEN_SIZE), jnp.float32)

        mask, out_states = seperation_block_stateful(x, st, params, **kw)
        jax.block_until_ready((mask, out_states))

        mask_exp, states_exp = reference(x, st, params)
        assert mask.shape == (batch, seq, INPUT_SIZE)
        assert out_states.shape == (2, batch, HIDDEN_SIZE)
        assert jnp.allclose(mask, mask_exp, rtol=1e-5, atol=1e-5), \
            f"mask mismatch (N={batch}, T={seq}, {kw})"
        assert jnp.allclose(out_states, states_exp, rtol=1e-5, atol=1e-5), \
            f"state mismatch (N={batch}, T={seq}, {kw})"

    keys = jax.random.split(k_rest, 3)
    # 1) Multi-chunk, ragged time axis: exercises the dynamic per-chunk trip
    #    count and the VMEM-carried recurrent state across chunks.
    run_case(keys[0], batch=2, seq=12, chunk_t=8)
    # 2) Two parallel batch groups (megacore / multi-TC path), full chunks,
    #    unrolled static time loop.
    run_case(keys[1], batch=9, seq=8, num_groups=2)
    # 3) Whole batch folded into a single NG>=8 group, two full time chunks.
    run_case(keys[2], batch=9, seq=16, chunk_t=8)

    print("KERNEL_OK")
</pallas_src>

<mosaic_0001>
module attributes {stable_mosaic.version = 11 : i64} {
  func.func @_sep_block_kernel(%arg0: i32, %arg1: i32, %arg2: memref<1x8x8x128xf32, #tpu.memory_space<vmem>>, %arg3: memref<2x1x8x128xf32, #tpu.memory_space<vmem>>, %arg4: memref<128x384xf32, #tpu.memory_space<vmem>>, %arg5: memref<128x384xf32, #tpu.memory_space<vmem>>, %arg6: memref<1x384xf32, #tpu.memory_space<vmem>>, %arg7: memref<1x128xf32, #tpu.memory_space<vmem>>, %arg8: memref<128x384xf32, #tpu.memory_space<vmem>>, %arg9: memref<128x384xf32, #tpu.memory_space<vmem>>, %arg10: memref<1x384xf32, #tpu.memory_space<vmem>>, %arg11: memref<1x128xf32, #tpu.memory_space<vmem>>, %arg12: memref<128x128xf32, #tpu.memory_space<vmem>>, %arg13: memref<1x128xf32, #tpu.memory_space<vmem>>, %arg14: memref<1x8x8x128xf32, #tpu.memory_space<vmem>>, %arg15: memref<2x1x8x128xf32, #tpu.memory_space<vmem>>, %arg16: memref<8x8x384xf32, #tpu.memory_space<vmem>>, %arg17: memref<8x8x128xf32, #tpu.memory_space<vmem>>, %arg18: memref<2x8x128xf32, #tpu.memory_space<vmem>>) attributes {dimension_semantics = [#tpu.dimension_semantics<parallel>, #tpu.dimension_semantics<arbitrary>], iteration_bounds = array<i64: 1, 2>, scalar_prefetch = 0 : i64, scratch_operands = 3 : i64, tpu.core_type = #tpu.core_type<tc>, window_params = [{transform_indices = @transform_0, window_bounds = array<i64: 1, 8, 8, 128>}, {transform_indices = @transform_1, window_bounds = array<i64: 2, 1, 8, 128>}, {pipeline_mode = #tpu.pipeline_mode<synchronous>, transform_indices = @transform_2, window_bounds = array<i64: 128, 384>}, {pipeline_mode = #tpu.pipeline_mode<synchronous>, transform_indices = @transform_3, window_bounds = array<i64: 128, 384>}, {pipeline_mode = #tpu.pipeline_mode<synchronous>, transform_indices = @transform_4, window_bounds = array<i64: 1, 384>}, {pipeline_mode = #tpu.pipeline_mode<synchronous>, transform_indices = @transform_5, window_bounds = array<i64: 1, 128>}, {pipeline_mode = #tpu.pipeline_mode<synchronous>, transform_indices = @transform_6, window_bounds = array<i64: 128, 384>}, {pipeline_mode = #tpu.pipeline_mode<synchronous>, transform_indices = @transform_7, window_bounds = array<i64: 128, 384>}, {pipeline_mode = #tpu.pipeline_mode<synchronous>, transform_indices = @transform_8, window_bounds = array<i64: 1, 384>}, {pipeline_mode = #tpu.pipeline_mode<synchronous>, transform_indices = @transform_9, window_bounds = array<i64: 1, 128>}, {pipeline_mode = #tpu.pipeline_mode<synchronous>, transform_indices = @transform_10, window_bounds = array<i64: 128, 128>}, {pipeline_mode = #tpu.pipeline_mode<synchronous>, transform_indices = @transform_11, window_bounds = array<i64: 1, 128>}, {transform_indices = @transform_12, window_bounds = array<i64: 1, 8, 8, 128>}, {transform_indices = @transform_13, window_bounds = array<i64: 2, 1, 8, 128>}]} {
    %c0_i32 = arith.constant 0 : i32
    %0 = arith.cmpi eq, %arg1, %c0_i32 : i32
    %1 = arith.extui %0 : i1 to i32
    %c0_i32_0 = arith.constant 0 : i32
    %2 = arith.cmpi ne, %1, %c0_i32_0 : i32
    scf.if %2 {
      %c0_47 = arith.constant 0 : index
      %c0_48 = arith.constant 0 : index
      %c0_49 = arith.constant 0 : index
      %c0_50 = arith.constant 0 : index
      %57 = vector.load %arg3[%c0_47, %c0_48, %c0_49, %c0_50] : memref<2x1x8x128xf32, #tpu.memory_space<vmem>>, vector<2x1x8x128xf32>
      %58 = vector.shape_cast %57 : vector<2x1x8x128xf32> to vector<2x8x128xf32>
      %c0_51 = arith.constant 0 : index
      %c0_52 = arith.constant 0 : index
      %c0_53 = arith.constant 0 : index
      %59 = vector.load %arg18[%c0_51, %c0_52, %c0_53] : memref<2x8x128xf32, #tpu.memory_space<vmem>>, vector<2x8x128xf32>
      tpu.vector_store %arg18[%c0_51, %c0_52, %c0_53], %58 {strides = array<i32>} : memref<2x8x128xf32, #tpu.memory_space<vmem>>, vector<2x8x128xf32>,
    } else {
    }
    %c0 = arith.constant 0 : index
    %c0_1 = arith.constant 0 : index
    %c0_2 = arith.constant 0 : index
    %c0_3 = arith.constant 0 : index
    %3 = vector.load %arg2[%c0, %c0_1, %c0_2, %c0_3] : memref<1x8x8x128xf32, #tpu.memory_space<vmem>>, vector<1x8x8x128xf32>
    %4 = vector.shape_cast %3 : vector<1x8x8x128xf32> to vector<8x8x128xf32>
    %5 = vector.shape_cast %4 : vector<8x8x128xf32> to vector<64x128xf32>
    %c0_4 = arith.constant 0 : index
    %c0_5 = arith.constant 0 : index
    %6 = vector.load %arg4[%c0_4, %c0_5] : memref<128x384xf32, #tpu.memory_space<vmem>>, vector<128x384xf32>
    %cst = arith.constant dense<0.000000e+00> : vector<64x384xf32>
    %7 = tpu.matmul %5, %6, %cst {dimension_numbers = #tpu.dot_dimension_numbers<[1], [0], [0], [1], [0, 0, 1, 1], [], []>} : vector<64x128xf32>, vector<128x384xf32>, vector<64x384xf32> -> vector<64x384xf32>
    %c0_6 = arith.constant 0 : index
    %c0_7 = arith.constant 0 : index
    %8 = vector.load %arg6[%c0_6, %c0_7] : memref<1x384xf32, #tpu.memory_space<vmem>>, vector<1x384xf32>
    %9 = vector.broadcast %8 : vector<1x384xf32> to vector<64x384xf32>
    %10 = arith.addf %7, %9 : vector<64x384xf32>
    %11 = vector.shape_cast %10 : vector<64x384xf32> to vector<8x8x384xf32>
    %c0_8 = arith.constant 0 : index
    %c0_9 = arith.constant 0 : index
    %c0_10 = arith.constant 0 : index
    %12 = vector.load %arg16[%c0_8, %c0_9, %c0_10] : memref<8x8x384xf32, #tpu.memory_space<vmem>>, vector<8x8x384xf32>
    tpu.vector_store %arg16[%c0_8, %c0_9, %c0_10], %11 {strides = array<i32>} : memref<8x8x384xf32, #tpu.memory_space<vmem>>, vector<8x8x384xf32>,
    %c0_11 = arith.constant 0 : index
    %c0_12 = arith.constant 0 : index
    %13 = vector.load %arg5[%c0_11, %c0_12] : memref<128x384xf32, #tpu.memory_space<vmem>>, vector<128x384xf32>
    %c0_13 = arith.constant 0 : index
    %c0_14 = arith.constant 0 : index
    %14 = vector.load %arg8[%c0_13, %c0_14] : memref<128x384xf32, #tpu.memory_space<vmem>>, vector<128x384xf32>
    %c0_15 = arith.constant 0 : index
    %c0_16 = arith.constant 0 : index
    %15 = vector.load %arg9[%c0_15, %c0_16] : memref<128x384xf32, #tpu.memory_space<vmem>>, vector<128x384xf32>
    %c0_17 = arith.constant 0 : index
    %c0_18 = arith.constant 0 : index
    %16 = vector.load %arg10[%c0_17, %c0_18] : memref<1x384xf32, #tpu.memory_space<vmem>>, vector<1x384xf32>
    %17 = vector.shape_cast %16 : vector<1x384xf32> to vector<1x384xf32>
    %18 = vector.broadcast %17 : vector<1x384xf32> to vector<8x384xf32>
    %c0_19 = arith.constant 0 : index
    %c0_20 = arith.constant 0 : index
    %19 = vector.load %arg7[%c0_19, %c0_20] : memref<1x128xf32, #tpu.memory_space<vmem>>, vector<1x128xf32>
    %20 = vector.shape_cast %19 : vector<1x128xf32> to vector<1x128xf32>
    %21 = vector.broadcast %20 : vector<1x128xf32> to vector<8x128xf32>
    %c0_21 = arith.constant 0 : index
    %c0_22 = arith.constant 0 : index
    %22 = vector.load %arg11[%c0_21, %c0_22] : memref<1x128xf32, #tpu.memory_space<vmem>>, vector<1x128xf32>
    %23 = vector.shape_cast %22 : vector<1x128xf32> to vector<1x128xf32>
    %24 = vector.broadcast %23 : vector<1x128xf32> to vector<8x128xf32>
    %c0_23 = arith.constant 0 : index
    %c0_24 = arith.constant 0 : index
    %c0_25 = arith.constant 0 : index
    %25 = vector.load %arg18[%c0_23, %c0_24, %c0_25] : memref<2x8x128xf32, #tpu.memory_space<vmem>>, vector<1x8x128xf32>
    %26 = vector.shape_cast %25 : vector<1x8x128xf32> to vector<8x128xf32>
    %c1 = arith.constant 1 : index
    %c0_26 = arith.constant 0 : index
    %c0_27 = arith.constant 0 : index
    %27 = vector.load %arg18[%c1, %c0_26, %c0_27] : memref<2x8x128xf32, #tpu.memory_space<vmem>>, vector<1x8x128xf32>
    %28 = vector.shape_cast %27 : vector<1x8x128xf32> to vector<8x128xf32>
    %c8_i32 = arith.constant 8 : i32
    %29 = arith.muli %arg1, %c8_i32 : i32
    %c12_i32 = arith.constant 12 : i32
    %30 = arith.subi %c12_i32, %29 : i32
    %c8_i32_28 = arith.constant 8 : i32
    %31 = arith.minsi %c8_i32_28, %30 : i32
    %c0_i32_29 = arith.constant 0 : i32
    %32 = arith.subi %31, %c0_i32_29 : i32
    %33 = arith.addi %c0_i32_29, %32 : i32
    %c1_i32 = arith.constant 1 : i32
    %34:2 = scf.for %arg19 = %c0_i32_29 to %33 step %c1_i32 iter_args(%arg20 = %26, %arg21 = %28) -> (vector<8x128xf32>, vector<8x128xf32>)  : i32 {
      %57 = arith.index_cast %arg19 : i32 to index
      %c0_47 = arith.constant 0 : index
      %c0_48 = arith.constant 0 : index
      %58 = vector.load %arg16[%57, %c0_47, %c0_48] : memref<8x8x384xf32, #tpu.memory_space<vmem>>, vector<1x8x384xf32>
      %59 = vector.shape_cast %58 : vector<1x8x384xf32> to vector<8x384xf32>
      %cst_49 = arith.constant dense<0.000000e+00> : vector<8x384xf32>
      %60 = tpu.matmul %arg20, %13, %cst_49 {dimension_numbers = #tpu.dot_dimension_numbers<[1], [0], [0], [1], [0, 0, 1, 1], [], []>} : vector<8x128xf32>, vector<128x384xf32>, vector<8x384xf32> -> vector<8x384xf32>
      %61 = vector.extract_strided_slice %59 {offsets = [0, 0], sizes = [8, 256], strides = [1, 1]} : vector<8x384xf32> to vector<8x256xf32>
      %62 = vector.extract_strided_slice %60 {offsets = [0, 0], sizes = [8, 256], strides = [1, 1]} : vector<8x384xf32> to vector<8x256xf32>
      %63 = arith.addf %61, %62 : vector<8x256xf32>
      %64 = arith.negf %63 : vector<8x256xf32>
      %65 = math.exp %64 : vector<8x256xf32>
      %cst_50 = arith.constant 1.000000e+00 : f32
      %66 = vector.broadcast %cst_50 : f32 to vector<8x256xf32>
      %67 = arith.addf %66, %65 : vector<8x256xf32>
      %68 = arith.divf %66, %67 : vector<8x256xf32>
      %69 = vector.extract_strided_slice %68 {offsets = [0, 0], sizes = [8, 128], strides = [1, 1]} : vector<8x256xf32> to vector<8x128xf32>
      %70 = vector.extract_strided_slice %68 {offsets = [0, 128], sizes = [8, 128], strides = [1, 1]} : vector<8x256xf32> to vector<8x128xf32>
      %71 = vector.extract_strided_slice %59 {offsets = [0, 256], sizes = [8, 128], strides = [1, 1]} : vector<8x384xf32> to vector<8x128xf32>
      %72 = vector.extract_strided_slice %60 {offsets = [0, 256], sizes = [8, 128], strides = [1, 1]} : vector<8x384xf32> to vector<8x128xf32>
      %73 = arith.addf %72, %21 : vector<8x128xf32>
      %74 = arith.mulf %69, %73 : vector<8x128xf32>
      %75 = arith.addf %71, %74 : vector<8x128xf32>
      %76 = math.tanh %75 : vector<8x128xf32>
      %cst_51 = arith.constant 1.000000e+00 : f32
      %77 = vector.broadcast %cst_51 : f32 to vector<8x128xf32>
      %78 = arith.subf %77, %70 : vector<8x128xf32>
      %79 = arith.mulf %78, %76 : vector<8x128xf32>
      %80 = arith.mulf %70, %arg20 : vector<8x128xf32>
      %81 = arith.addf %79, %80 : vector<8x128xf32>
      %cst_52 = arith.constant dense<0.000000e+00> : vector<8x384xf32>
      %82 = tpu.matmul %81, %14, %cst_52 {dimension_numbers = #tpu.dot_dimension_numbers<[1], [0], [0], [1], [0, 0, 1, 1], [], []>} : vector<8x128xf32>, vector<128x384xf32>, vector<8x384xf32> -> vector<8x384xf32>
      %83 = arith.addf %82, %18 : vector<8x384xf32>
      %cst_53 = arith.constant dense<0.000000e+00> : vector<8x384xf32>
      %84 = tpu.matmul %arg21, %15, %cst_53 {dimension_numbers = #tpu.dot_dimension_numbers<[1], [0], [0], [1], [0, 0, 1, 1], [], []>} : vector<8x128xf32>, vector<128x384xf32>, vector<8x384xf32> -> vector<8x384xf32>
      %85 = vector.extract_strided_slice %83 {offsets = [0, 0], sizes = [8, 256], strides = [1, 1]} : vector<8x384xf32> to vector<8x256xf32>
      %86 = vector.extract_strided_slice %84 {offsets = [0, 0], sizes = [8, 256], strides = [1, 1]} : vector<8x384xf32> to vector<8x256xf32>
      %87 = arith.addf %85, %86 : vector<8x256xf32>
      %88 = arith.negf %87 : vector<8x256xf32>
      %89 = math.exp %88 : vector<8x256xf32>
      %cst_54 = arith.constant 1.000000e+00 : f32
      %90 = vector.broadcast %cst_54 : f32 to vector<8x256xf32>
      %91 = arith.addf %90, %89 : vector<8x256xf32>
      %92 = arith.divf %90, %91 : vector<8x256xf32>
      %93 = vector.extract_strided_slice %92 {offsets = [0, 0], sizes = [8, 128], strides = [1, 1]} : vector<8x256xf32> to vector<8x128xf32>
      %94 = vector.extract_strided_slice %92 {offsets = [0, 128], sizes = [8, 128], strides = [1, 1]} : vector<8x256xf32> to vector<8x128xf32>
      %95 = vector.extract_strided_slice %83 {offsets = [0, 256], sizes = [8, 128], strides = [1, 1]} : vector<8x384xf32> to vector<8x128xf32>
      %96 = vector.extract_strided_slice %84 {offsets = [0, 256], sizes = [8, 128], strides = [1, 1]} : vector<8x384xf32> to vector<8x128xf32>
      %97 = arith.addf %96, %24 : vector<8x128xf32>
      %98 = arith.mulf %93, %97 : vector<8x128xf32>
      %99 = arith.addf %95, %98 : vector<8x128xf32>
      %100 = math.tanh %99 : vector<8x128xf32>
      %cst_55 = arith.constant 1.000000e+00 : f32
      %101 = vector.broadcast %cst_55 : f32 to vector<8x128xf32>
      %102 = arith.subf %101, %94 : vector<8x128xf32>
      %103 = arith.mulf %102, %100 : vector<8x128xf32>
      %104 = arith.mulf %94, %arg21 : vector<8x128xf32>
      %105 = arith.addf %103, %104 : vector<8x128xf32>
      %106 = arith.index_cast %arg19 : i32 to index
      %c0_56 = arith.constant 0 : index
      %c0_57 = arith.constant 0 : index
      %107 = vector.load %arg17[%106, %c0_56, %c0_57] : memref<8x8x128xf32, #tpu.memory_space<vmem>>, vector<1x8x128xf32>
      %108 = vector.shape_cast %107 : vector<1x8x128xf32> to vector<8x128xf32>
      %109 = vector.shape_cast %105 : vector<8x128xf32> to vector<1x8x128xf32>
      tpu.vector_store %arg17[%106, %c0_56, %c0_57], %109 {strides = array<i32>} : memref<8x8x128xf32, #tpu.memory_space<vmem>>, vector<1x8x128xf32>,
      scf.yield %81, %105 : vector<8x128xf32>, vector<8x128xf32>
    }
    %c1_i32_30 = arith.constant 1 : i32
    %35 = arith.cmpi ne, %arg1, %c1_i32_30 : i32
    %36 = arith.extui %35 : i1 to i32
    %c0_i32_31 = arith.constant 0 : i32
    %37 = arith.cmpi ne, %36, %c0_i32_31 : i32
    scf.if %37 {
      %c0_47 = arith.constant 0 : index
      %c0_48 = arith.constant 0 : index
      %c0_49 = arith.constant 0 : index
      %57 = vector.load %arg18[%c0_47, %c0_48, %c0_49] : memref<2x8x128xf32, #tpu.memory_space<vmem>>, vector<1x8x128xf32>
      %58 = vector.shape_cast %57 : vector<1x8x128xf32> to vector<8x128xf32>
      %59 = vector.shape_cast %34#0 : vector<8x128xf32> to vector<1x8x128xf32>
      tpu.vector_store %arg18[%c0_47, %c0_48, %c0_49], %59 {strides = array<i32>} : memref<2x8x128xf32, #tpu.memory_space<vmem>>, vector<1x8x128xf32>,
      %c1_50 = arith.constant 1 : index
      %c0_51 = arith.constant 0 : index
      %c0_52 = arith.constant 0 : index
      %60 = vector.load %arg18[%c1_50, %c0_51, %c0_52] : memref<2x8x128xf32, #tpu.memory_space<vmem>>, vector<1x8x128xf32>
      %61 = vector.shape_cast %60 : vector<1x8x128xf32> to vector<8x128xf32>
      %62 = vector.shape_cast %34#1 : vector<8x128xf32> to vector<1x8x128xf32>
      tpu.vector_store %arg18[%c1_50, %c0_51, %c0_52], %62 {strides = array<i32>} : memref<2x8x128xf32, #tpu.memory_space<vmem>>, vector<1x8x128xf32>,
    } else {
    }
    %c1_i32_32 = arith.constant 1 : i32
    %38 = arith.cmpi eq, %arg1, %c1_i32_32 : i32
    %39 = arith.extui %38 : i1 to i32
    %c0_i32_33 = arith.constant 0 : i32
    %40 = arith.cmpi ne, %39, %c0_i32_33 : i32
    scf.if %40 {
      %c0_47 = arith.constant 0 : index
      %c0_48 = arith.constant 0 : index
      %c0_49 = arith.constant 0 : index
      %c0_50 = arith.constant 0 : index
      %57 = vector.load %arg15[%c0_47, %c0_48, %c0_49, %c0_50] : memref<2x1x8x128xf32, #tpu.memory_space<vmem>>, vector<1x1x8x128xf32>
      %58 = vector.shape_cast %57 : vector<1x1x8x128xf32> to vector<8x128xf32>
      %59 = vector.shape_cast %34#0 : vector<8x128xf32> to vector<1x1x8x128xf32>
      tpu.vector_store %arg15[%c0_47, %c0_48, %c0_49, %c0_50], %59 {strides = array<i32>} : memref<2x1x8x128xf32, #tpu.memory_space<vmem>>, vector<1x1x8x128xf32>,
      %c1_51 = arith.constant 1 : index
      %c0_52 = arith.constant 0 : index
      %c0_53 = arith.constant 0 : index
      %c0_54 = arith.constant 0 : index
      %60 = vector.load %arg15[%c1_51, %c0_52, %c0_53, %c0_54] : memref<2x1x8x128xf32, #tpu.memory_space<vmem>>, vector<1x1x8x128xf32>
      %61 = vector.shape_cast %60 : vector<1x1x8x128xf32> to vector<8x128xf32>
      %62 = vector.shape_cast %34#1 : vector<8x128xf32> to vector<1x1x8x128xf32>
      tpu.vector_store %arg15[%c1_51, %c0_52, %c0_53, %c0_54], %62 {strides = array<i32>} : memref<2x1x8x128xf32, #tpu.memory_space<vmem>>, vector<1x1x8x128xf32>,
    } else {
    }
    %c0_34 = arith.constant 0 : index
    %c0_35 = arith.constant 0 : index
    %c0_36 = arith.constant 0 : index
    %41 = vector.load %arg17[%c0_34, %c0_35, %c0_36] : memref<8x8x128xf32, #tpu.memory_space<vmem>>, vector<8x8x128xf32>
    %42 = vector.shape_cast %41 : vector<8x8x128xf32> to vector<64x128xf32>
    %c0_37 = arith.constant 0 : index
    %c0_38 = arith.constant 0 : index
    %43 = vector.load %arg12[%c0_37, %c0_38] : memref<128x128xf32, #tpu.memory_space<vmem>>, vector<128x128xf32>
    %cst_39 = arith.constant dense<0.000000e+00> : vector<64x128xf32>
    %44 = tpu.matmul %42, %43, %cst_39 {dimension_numbers = #tpu.dot_dimension_numbers<[1], [0], [0], [1], [0, 0, 1, 1], [], []>} : vector<64x128xf32>, vector<128x128xf32>, vector<64x128xf32> -> vector<64x128xf32>
    %c0_40 = arith.constant 0 : index
    %c0_41 = arith.constant 0 : index
    %45 = vector.load %arg13[%c0_40, %c0_41] : memref<1x128xf32, #tpu.memory_space<vmem>>, vector<1x128xf32>
    %46 = vector.broadcast %45 : vector<1x128xf32> to vector<64x128xf32>
    %47 = arith.addf %44, %46 : vector<64x128xf32>
    %48 = arith.negf %47 : vector<64x128xf32>
    %49 = math.exp %48 : vector<64x128xf32>
    %cst_42 = arith.constant 1.000000e+00 : f32
    %50 = vector.broadcast %cst_42 : f32 to vector<64x128xf32>
    %51 = arith.addf %50, %49 : vector<64x128xf32>
    %52 = arith.divf %50, %51 : vector<64x128xf32>
    %53 = vector.shape_cast %52 : vector<64x128xf32> to vector<8x8x128xf32>
    %c0_43 = arith.constant 0 : index
    %c0_44 = arith.constant 0 : index
    %c0_45 = arith.constant 0 : index
    %c0_46 = arith.constant 0 : index
    %54 = vector.load %arg14[%c0_43, %c0_44, %c0_45, %c0_46] : memref<1x8x8x128xf32, #tpu.memory_space<vmem>>, vector<1x8x8x128xf32>
    %55 = vector.shape_cast %54 : vector<1x8x8x128xf32> to vector<8x8x128xf32>
    %56 = vector.shape_cast %53 : vector<8x8x128xf32> to vector<1x8x8x128xf32>
    tpu.vector_store %arg14[%c0_43, %c0_44, %c0_45, %c0_46], %56 {strides = array<i32>} : memref<1x8x8x128xf32, #tpu.memory_space<vmem>>, vector<1x8x8x128xf32>,
    return
  }
  func.func @transform_0(%arg0: i32, %arg1: i32) -> (i32, i32, i32, i32) {
    %c0_i32 = arith.constant 0 : i32
    %c0_i32_0 = arith.constant 0 : i32
    %c0_i32_1 = arith.constant 0 : i32
    return %arg0, %arg1, %c0_i32, %c0_i32_0 : i32, i32, i32, i32
  }
  func.func @transform_1(%arg0: i32, %arg1: i32) -> (i32, i32, i32, i32) {
    %c0_i32 = arith.constant 0 : i32
    %c0_i32_0 = arith.constant 0 : i32
    %c0_i32_1 = arith.constant 0 : i32
    %c0_i32_2 = arith.constant 0 : i32
    return %c0_i32, %arg0, %c0_i32_0, %c0_i32_1 : i32, i32, i32, i32
  }
  func.func @transform_2(%arg0: i32, %arg1: i32) -> (i32, i32) {
    %c0_i32 = arith.constant 0 : i32
    %c0_i32_0 = arith.constant 0 : i32
    %c0_i32_1 = arith.constant 0 : i32
    return %c0_i32, %c0_i32_0 : i32, i32
  }
  func.func @transform_3(%arg0: i32, %arg1: i32) -> (i32, i32) {
    %c0_i32 = arith.constant 0 : i32
    %c0_i32_0 = arith.constant 0 : i32
    %c0_i32_1 = arith.constant 0 : i32
    return %c0_i32, %c0_i32_0 : i32, i32
  }
  func.func @transform_4(%arg0: i32, %arg1: i32) -> (i32, i32) {
    %c0_i32 = arith.constant 0 : i32
    %c0_i32_0 = arith.constant 0 : i32
    %c0_i32_1 = arith.constant 0 : i32
    return %c0_i32, %c0_i32_0 : i32, i32
  }
  func.func @transform_5(%arg0: i32, %arg1: i32) -> (i32, i32) {
    %c0_i32 = arith.constant 0 : i32
    %c0_i32_0 = arith.constant 0 : i32
    %c0_i32_1 = arith.constant 0 : i32
    return %c0_i32, %c0_i32_0 : i32, i32
  }
  func.func @transform_6(%arg0: i32, %arg1: i32) -> (i32, i32) {
    %c0_i32 = arith.constant 0 : i32
    %c0_i32_0 = arith.constant 0 : i32
    %c0_i32_1 = arith.constant 0 : i32
    return %c0_i32, %c0_i32_0 : i32, i32
  }
  func.func @transform_7(%arg0: i32, %arg1: i32) -> (i32, i32) {
    %c0_i32 = arith.constant 0 : i32
    %c0_i32_0 = arith.constant 0 : i32
    %c0_i32_1 = arith.constant 0 : i32
    return %c0_i32, %c0_i32_0 : i32, i32
  }
  func.func @transform_8(%arg0: i32, %arg1: i32) -> (i32, i32) {
    %c0_i32 = arith.constant 0 : i32
    %c0_i32_0 = arith.constant 0 : i32
    %c0_i32_1 = arith.constant 0 : i32
    return %c0_i32, %c0_i32_0 : i32, i32
  }
  func.func @transform_9(%arg0: i32, %arg1: i32) -> (i32, i32) {
    %c0_i32 = arith.constant 0 : i32
    %c0_i32_0 = arith.constant 0 : i32
    %c0_i32_1 = arith.constant 0 : i32
    return %c0_i32, %c0_i32_0 : i32, i32
  }
  func.func @transform_10(%arg0: i32, %arg1: i32) -> (i32, i32) {
    %c0_i32 = arith.constant 0 : i32
    %c0_i32_0 = arith.constant 0 : i32
    %c0_i32_1 = arith.constant 0 : i32
    return %c0_i32, %c0_i32_0 : i32, i32
  }
  func.func @transform_11(%arg0: i32, %arg1: i32) -> (i32, i32) {
    %c0_i32 = arith.constant 0 : i32
    %c0_i32_0 = arith.constant 0 : i32
    %c0_i32_1 = arith.constant 0 : i32
    return %c0_i32, %c0_i32_0 : i32, i32
  }
  func.func @transform_12(%arg0: i32, %arg1: i32) -> (i32, i32, i32, i32) {
    %c0_i32 = arith.constant 0 : i32
    %c0_i32_0 = arith.constant 0 : i32
    %c0_i32_1 = arith.constant 0 : i32
    return %arg0, %arg1, %c0_i32, %c0_i32_0 : i32, i32, i32, i32
  }
  func.func @transform_13(%arg0: i32, %arg1: i32) -> (i32, i32, i32, i32) {
    %c0_i32 = arith.constant 0 : i32
    %c0_i32_0 = arith.constant 0 : i32
    %c0_i32_1 = arith.constant 0 : i32
    %c0_i32_2 = arith.constant 0 : i32
    return %c0_i32, %arg0, %c0_i32_0, %c0_i32_1 : i32, i32, i32, i32
  }
}

</mosaic_0001>

<llo_original>
// kernel: _sep_impl.1
$region0: #{_sep_impl.1}
  #allocation0 [shape = 'u32[]', space=smem, size = 0x4, offset = 0x4, fixed_abs, tag = 'smem constant byte address 0x4 - core index']
  #allocation1 [shape = 'u32[144,128]{1,0:T(1,128)}', space=vmem, size = 0x12000, scoped, tag = 'internal scratch']
  #allocation2 [shape = 'f32[8,8,384]{2,1,0:T(8,128)}', space=vmem, size = 0x18000, scoped, tag = 'scratch operand']
  #allocation3 [shape = 'f32[8,8,128]{2,1,0:T(8,128)}', space=vmem, size = 0x8000, scoped, tag = 'scratch operand']
  #allocation4 [shape = 'f32[2,8,128]{2,1,0:T(8,128)}', space=vmem, size = 0x2000, scoped, tag = 'scratch operand']
  %s0 = inlined_call_operand.hbm [shape: f32[1,16,8,128], index: 0, kind: input, shape index: {}]
  %s1 = inlined_call_operand.hbm [shape: f32[2,1,8,128], index: 1, kind: input, shape index: {}]
  %s2 = inlined_call_operand.hbm [shape: f32[128,384], index: 2, kind: input, shape index: {}]
  %s3 = inlined_call_operand.hbm [shape: f32[128,384], index: 3, kind: input, shape index: {}]
  %s4 = inlined_call_operand.hbm [shape: f32[1,384], index: 4, kind: input, shape index: {}]
  %s5 = inlined_call_operand.hbm [shape: f32[1,128], index: 5, kind: input, shape index: {}]
  %s6 = inlined_call_operand.hbm [shape: f32[128,384], index: 6, kind: input, shape index: {}]
  %s7 = inlined_call_operand.hbm [shape: f32[128,384], index: 7, kind: input, shape index: {}]
  %s8 = inlined_call_operand.hbm [shape: f32[1,384], index: 8, kind: input, shape index: {}]
  %s9 = inlined_call_operand.hbm [shape: f32[1,128], index: 9, kind: input, shape index: {}]
  %s10 = inlined_call_operand.hbm [shape: f32[128,128], index: 10, kind: input, shape index: {}]
  %s11 = inlined_call_operand.hbm [shape: f32[1,128], index: 11, kind: input, shape index: {}]
  %s12 = inlined_call_operand.hbm [shape: f32[1,16,8,128], index: 12, kind: output, shape index: {0}]
  %s13 = inlined_call_operand.hbm [shape: f32[2,1,8,128], index: 13, kind: output, shape index: {1}]
  %14 = xla_tuple %s12, %s13
  %s15 = sld [smem:[#allocation0]]
  $region156: #{_sep_impl.1} parent=0
    _
  %s17 = ssub.s32 1, %s15
  %s18 = scalar_select 0, %s17, %s15
  $region1: #{_sep_impl.1} parent=0
    #allocation5 [shape = 'u8[65536]{0}', space=vmem, size = 0x10000, scoped, tag = 'input window, operand 0']
    #allocation6 [shape = 's32[2]{0}', space=sflag, size = 0x8, scoped, tag = 'scoped memory for _sep_impl.1']
    #allocation7 [shape = 's32[2]{0}', space=sflag, size = 0x8, scoped, tag = 'scoped memory for _sep_impl.1']
    #allocation8 [shape = 'u8[8192]{0}', space=vmem, size = 0x2000, scoped, tag = 'input window, operand 1, single buffered']
    #allocation9 [shape = 's32[1]{0}', space=sflag, size = 0x4, scoped, tag = 'scoped memory for _sep_impl.1']
    #allocation10 [shape = 'u8[196608]{0}', space=vmem, size = 0x30000, scoped, tag = 'input window, operand 2, single buffered']
    #allocation11 [shape = 'u8[196608]{0}', space=vmem, size = 0x30000, scoped, tag = 'input window, operand 3, single buffered']
    #allocation12 [shape = 's32[1]{0}', space=sflag, size = 0x4, scoped, tag = 'scoped memory for _sep_impl.1']
    #allocation13 [shape = 'u8[1536]{0}', space=vmem, size = 0x800, scoped, tag = 'input window, operand 4, single buffered']
    #allocation14 [shape = 'u8[512]{0}', space=vmem, size = 0x400, scoped, tag = 'input window, operand 5, single buffered']
    #allocation15 [shape = 's32[1]{0}', space=sflag, size = 0x4, scoped, tag = 'scoped memory for _sep_impl.1']
    #allocation16 [shape = 'u8[196608]{0}', space=vmem, size = 0x30000, scoped, tag = 'input window, operand 6, single buffered']
    #allocation17 [shape = 'u8[196608]{0}', space=vmem, size = 0x30000, scoped, tag = 'input window, operand 7, single buffered']
    #allocation18 [shape = 's32[1]{0}', space=sflag, size = 0x4, scoped, tag = 'scoped memory for _sep_impl.1']
    #allocation19 [shape = 'u8[1536]{0}', space=vmem, size = 0x800, scoped, tag = 'input window, operand 8, single buffered']
    #allocation20 [shape = 'u8[512]{0}', space=vmem, size = 0x400, scoped, tag = 'input window, operand 9, single buffered']
    #allocation21 [shape = 's32[1]{0}', space=sflag, size = 0x4, scoped, tag = 'scoped memory for _sep_impl.1']
    #allocation22 [shape = 'u8[65536]{0}', space=vmem, size = 0x10000, scoped, tag = 'input window, operand 10, single buffered']
    #allocation23 [shape = 'u8[512]{0}', space=vmem, size = 0x400, scoped, tag = 'input window, operand 11, single buffered']
    #allocation24 [shape = 's32[1]{0}', space=sflag, size = 0x4, scoped, tag = 'scoped memory for _sep_impl.1']
    #allocation25 [shape = 'u8[65536]{0}', space=vmem, size = 0x10000, scoped, tag = 'output window, operand 0']
    #allocation26 [shape = 'u8[8192]{0}', space=vmem, size = 0x2000, scoped, tag = 'output window, operand 1, single buffered']
    #allocation27 [shape = 's32[1]{0}', space=sflag, size = 0x4, scoped, tag = 'scoped memory for _sep_impl.1']
    %19 = vsyncpa [#allocation6], 0
    %s20 = scalar_lea.sflag [#allocation6], 1
    %21 = vsyncpa %s20, 0
    %22 = vsyncpa [#allocation9], 0
    %23 = vsyncpa [#allocation12], 0
    %24 = vsyncpa [#allocation15], 0
    %25 = vsyncpa [#allocation18], 0
    %26 = vsyncpa [#allocation21], 0
    %27 = vsyncpa [#allocation24], 0
    %28 = vsyncpa [#allocation7], 0
    %s29 = scalar_lea.sflag [#allocation7], 1
    %30 = vsyncpa %s29, 0
    %31 = vsyncpa [#allocation27], 0
    loop: start=0, step=1, limit=4
    $region2: #{_sep_impl.1} parent=1 // loop_pre_header
      _
    $region3: #{_sep_impl.1} parent=1 // loop_header
      %s33 = sphi 0, %s37
      %p34 = scmp.ge.s32.totalorder %s33, 4
      %s40 = sphi 0, %s52
      %s41 = sphi 0, %s48
      %s42 = sphi 0, %s40
      %s43 = sphi 0, %s41
      %s44 = sphi 0, %s42
      %s45 = sphi 0, %s43
      %s57 = sphi 0, %s59
      %s60 = sphi 0, %s57
      %s61 = sphi 0, %s60
      %s77 = sphi 0, %s61
      %s83 = sphi 0, %s85
      %s86 = sphi 0, %s83
      %s87 = sphi 0, %s86
      %s103 = sphi 0, %s87
      %s107 = sphi 0, %s107
      %s109 = sphi 0, %s107
      %s110 = sphi 0, %s109
      %s124 = sphi 0, %s110
      %s128 = sphi 0, %s128
      %s130 = sphi 0, %s128
      %s131 = sphi 0, %s130
      %s145 = sphi 0, %s131
      %s149 = sphi 0, %s149
      %s151 = sphi 0, %s149
      %s152 = sphi 0, %s151
      %s166 = sphi 0, %s152
      %s170 = sphi 0, %s170
      %s172 = sphi 0, %s170
      %s173 = sphi 0, %s172
      %s187 = sphi 0, %s173
      %s191 = sphi 0, %s191
      %s193 = sphi 0, %s191
      %s194 = sphi 0, %s193
      %s208 = sphi 0, %s194
      %s212 = sphi 0, %s212
      %s214 = sphi 0, %s212
      %s215 = sphi 0, %s214
      %s229 = sphi 0, %s215
      %s233 = sphi 0, %s233
      %s235 = sphi 0, %s233
      %s236 = sphi 0, %s235
      %s250 = sphi 0, %s236
      %s254 = sphi 0, %s254
      %s256 = sphi 0, %s254
      %s257 = sphi 0, %s256
      %s271 = sphi 0, %s257
      %s275 = sphi 0, %s275
      %s277 = sphi 0, %s275
      %s278 = sphi 0, %s277
      %s292 = sphi 0, %s278
      %s296 = sphi 0, %s296
      %s298 = sphi 0, %s296
      %s299 = sphi 0, %s298
      %s313 = sphi 0, %s299
      %s321 = sphi 0, %s323
      %s324 = sphi 0, %s321
      %s325 = sphi 0, %s324
      %s341 = sphi 0, %s325
      %s347 = sphi 0, %s349
      %s350 = sphi 0, %s347
      %s351 = sphi 0, %s350
      %s367 = sphi 0, %s351
    $region4: #{_sep_impl.1} parent=1 // loop_header_branch
      %36 = sbr.rel (%p34) target = $region8
    $region5: #{_sep_impl.1} parent=1 // loop_body
      %s38 = ssub.s32 %s33, 1
      %s39 = ssub.s32 %s33, 2
      %s46 = sadd.s32 1, %s41
      %p47 = scmp.ge.s32.totalorder %s46, 2
      %s48 = scalar_select %p47, 0, %s46
      %s49 = sadd.s32 1, %s40
      %s50 = scalar_select %p47, %s49, %s40
      %p51 = scmp.ge.s32.totalorder %s50, 1
      %s52 = scalar_select %p51, 0, %s50
      %s53 = ssub.s32 %s40, %s52
      %s54 = ssub.s32 %s41, %s48
      %s55 = sor.u32 %s53, %s54
      %p56 = scmp.eq.s32.totalorder %s55, 0
      %s58 = sadd.s32 %s57, 1
      %s59 = scalar_select %p56, %s57, %s58
      %p62 = pneg %p56
      %p63 = scmp.eq.s32.totalorder %s33, 1
      %p64 = por %p62, %p63
      %p65 = scmp.ne.s32.totalorder %s57, %s60
      %p66 = scmp.eq.s32.totalorder %s33, 0
      %p67 = por %p65, %p66
      %p68 = scmp.ne.s32.totalorder %s57, %s60
      %p69 = scmp.eq.s32.totalorder %s38, 1
      %p70 = por %p68, %p69
      %p71 = scmp.ne.s32.totalorder %s60, %s61
      %p72 = scmp.eq.s32.totalorder %s38, 0
      %p73 = por %p71, %p72
      %p74 = scmp.ne.s32.totalorder %s60, %s61
      %p75 = scmp.eq.s32.totalorder %s39, 1
      %p76 = por %p74, %p75
      %p78 = scmp.ne.s32.totalorder %s61, %s77
      %p79 = scmp.eq.s32.totalorder %s39, 0
      %p80 = por %p78, %p79
      %s81 = ssub.s32 %s40, %s52
      %p82 = scmp.eq.s32.totalorder %s81, 0
      %s84 = sadd.s32 %s83, 1
      %s85 = scalar_select %p82, %s83, %s84
      %p88 = pneg %p82
      %p89 = scmp.eq.s32.totalorder %s33, 1
      %p90 = por %p88, %p89
      %p91 = scmp.ne.s32.totalorder %s83, %s86
      %p92 = scmp.eq.s32.totalorder %s33, 0
      %p93 = por %p91, %p92
      %p94 = scmp.ne.s32.totalorder %s83, %s86
      %p95 = scmp.eq.s32.totalorder %s38, 1
      %p96 = por %p94, %p95
      %p97 = scmp.ne.s32.totalorder %s86, %s87
      %p98 = scmp.eq.s32.totalorder %s38, 0
      %p99 = por %p97, %p98
      %p100 = scmp.ne.s32.totalorder %s86, %s87
      %p101 = scmp.eq.s32.totalorder %s39, 1
      %p102 = por %p100, %p101
      %p104 = scmp.ne.s32.totalorder %s87, %s103
      %p105 = scmp.eq.s32.totalorder %s39, 0
      %p106 = por %p104, %p105
      %s108 = sadd.s32 %s107, 1
      %p111 = scmp.eq.s32.totalorder %s33, 1
      %p112 = scmp.ne.s32.totalorder %s107, %s109
      %p113 = scmp.eq.s32.totalorder %s33, 0
      %p114 = por %p112, %p113
      %p115 = scmp.ne.s32.totalorder %s107, %s109
      %p116 = scmp.eq.s32.totalorder %s38, 1
      %p117 = por %p115, %p116
      %p118 = scmp.ne.s32.totalorder %s109, %s110
      %p119 = scmp.eq.s32.totalorder %s38, 0
      %p120 = por %p118, %p119
      %p121 = scmp.ne.s32.totalorder %s109, %s110
      %p122 = scmp.eq.s32.totalorder %s39, 1
      %p123 = por %p121, %p122
      %p125 = scmp.ne.s32.totalorder %s110, %s124
      %p126 = scmp.eq.s32.totalorder %s39, 0
      %p127 = por %p125, %p126
      %s129 = sadd.s32 %s128, 1
      %p132 = scmp.eq.s32.totalorder %s33, 1
      %p133 = scmp.ne.s32.totalorder %s128, %s130
      %p134 = scmp.eq.s32.totalorder %s33, 0
      %p135 = por %p133, %p134
      %p136 = scmp.ne.s32.totalorder %s128, %s130
      %p137 = scmp.eq.s32.totalorder %s38, 1
      %p138 = por %p136, %p137
      %p139 = scmp.ne.s32.totalorder %s130, %s131
      %p140 = scmp.eq.s32.totalorder %s38, 0
      %p141 = por %p139, %p140
      %p142 = scmp.ne.s32.totalorder %s130, %s131
      %p143 = scmp.eq.s32.totalorder %s39, 1
      %p144 = por %p142, %p143
      %p146 = scmp.ne.s32.totalorder %s131, %s145
      %p147 = scmp.eq.s32.totalorder %s39, 0
      %p148 = por %p146, %p147
      %s150 = sadd.s32 %s149, 1
      %p153 = scmp.eq.s32.totalorder %s33, 1
      %p154 = scmp.ne.s32.totalorder %s149, %s151
      %p155 = scmp.eq.s32.totalorder %s33, 0
      %p156 = por %p154, %p155
      %p157 = scmp.ne.s32.totalorder %s149, %s151
      %p158 = scmp.eq.s32.totalorder %s38, 1
      %p159 = por %p157, %p158
      %p160 = scmp.ne.s32.totalorder %s151, %s152
      %p161 = scmp.eq.s32.totalorder %s38, 0
      %p162 = por %p160, %p161
      %p163 = scmp.ne.s32.totalorder %s151, %s152
      %p164 = scmp.eq.s32.totalorder %s39, 1
      %p165 = por %p163, %p164
      %p167 = scmp.ne.s32.totalorder %s152, %s166
      %p168 = scmp.eq.s32.totalorder %s39, 0
      %p169 = por %p167, %p168
      %s171 = sadd.s32 %s170, 1
      %p174 = scmp.eq.s32.totalorder %s33, 1
      %p175 = scmp.ne.s32.totalorder %s170, %s172
      %p176 = scmp.eq.s32.totalorder %s33, 0
      %p177 = por %p175, %p176
      %p178 = scmp.ne.s32.totalorder %s170, %s172
      %p179 = scmp.eq.s32.totalorder %s38, 1
      %p180 = por %p178, %p179
      %p181 = scmp.ne.s32.totalorder %s172, %s173
      %p182 = scmp.eq.s32.totalorder %s38, 0
      %p183 = por %p181, %p182
      %p184 = scmp.ne.s32.totalorder %s172, %s173
      %p185 = scmp.eq.s32.totalorder %s39, 1
      %p186 = por %p184, %p185
      %p188 = scmp.ne.s32.totalorder %s173, %s187
      %p189 = scmp.eq.s32.totalorder %s39, 0
      %p190 = por %p188, %p189
      %s192 = sadd.s32 %s191, 1
      %p195 = scmp.eq.s32.totalorder %s33, 1
      %p196 = scmp.ne.s32.totalorder %s191, %s193
      %p197 = scmp.eq.s32.totalorder %s33, 0
      %p198 = por %p196, %p197
      %p199 = scmp.ne.s32.totalorder %s191, %s193
      %p200 = scmp.eq.s32.totalorder %s38, 1
      %p201 = por %p199, %p200
      %p202 = scmp.ne.s32.totalorder %s193, %s194
      %p203 = scmp.eq.s32.totalorder %s38, 0
      %p204 = por %p202, %p203
      %p205 = scmp.ne.s32.totalorder %s193, %s194
      %p206 = scmp.eq.s32.totalorder %s39, 1
      %p207 = por %p205, %p206
      %p209 = scmp.ne.s32.totalorder %s194, %s208
      %p210 = scmp.eq.s32.totalorder %s39, 0
      %p211 = por %p209, %p210
      %s213 = sadd.s32 %s212, 1
      %p216 = scmp.eq.s32.totalorder %s33, 1
      %p217 = scmp.ne.s32.totalorder %s212, %s214
      %p218 = scmp.eq.s32.totalorder %s33, 0
      %p219 = por %p217, %p218
      %p220 = scmp.ne.s32.totalorder %s212, %s214
      %p221 = scmp.eq.s32.totalorder %s38, 1
      %p222 = por %p220, %p221
      %p223 = scmp.ne.s32.totalorder %s214, %s215
      %p224 = scmp.eq.s32.totalorder %s38, 0
      %p225 = por %p223, %p224
      %p226 = scmp.ne.s32.totalorder %s214, %s215
      %p227 = scmp.eq.s32.totalorder %s39, 1
      %p228 = por %p226, %p227
      %p230 = scmp.ne.s32.totalorder %s215, %s229
      %p231 = scmp.eq.s32.totalorder %s39, 0
      %p232 = por %p230, %p231
      %s234 = sadd.s32 %s233, 1
      %p237 = scmp.eq.s32.totalorder %s33, 1
      %p238 = scmp.ne.s32.totalorder %s233, %s235
      %p239 = scmp.eq.s32.totalorder %s33, 0
      %p240 = por %p238, %p239
      %p241 = scmp.ne.s32.totalorder %s233, %s235
      %p242 = scmp.eq.s32.totalorder %s38, 1
      %p243 = por %p241, %p242
      %p244 = scmp.ne.s32.totalorder %s235, %s236
      %p245 = scmp.eq.s32.totalorder %s38, 0
      %p246 = por %p244, %p245
      %p247 = scmp.ne.s32.totalorder %s235, %s236
      %p248 = scmp.eq.s32.totalorder %s39, 1
      %p249 = por %p247, %p248
      %p251 = scmp.ne.s32.totalorder %s236, %s250
      %p252 = scmp.eq.s32.totalorder %s39, 0
      %p253 = por %p251, %p252
      %s255 = sadd.s32 %s254, 1
      %p258 = scmp.eq.s32.totalorder %s33, 1
      %p259 = scmp.ne.s32.totalorder %s254, %s256
      %p260 = scmp.eq.s32.totalorder %s33, 0
      %p261 = por %p259, %p260
      %p262 = scmp.ne.s32.totalorder %s254, %s256
      %p263 = scmp.eq.s32.totalorder %s38, 1
      %p264 = por %p262, %p263
      %p265 = scmp.ne.s32.totalorder %s256, %s257
      %p266 = scmp.eq.s32.totalorder %s38, 0
      %p267 = por %p265, %p266
      %p268 = scmp.ne.s32.totalorder %s256, %s257
      %p269 = scmp.eq.s32.totalorder %s39, 1
      %p270 = por %p268, %p269
      %p272 = scmp.ne.s32.totalorder %s257, %s271
      %p273 = scmp.eq.s32.totalorder %s39, 0
      %p274 = por %p272, %p273
      %s276 = sadd.s32 %s275, 1
      %p279 = scmp.eq.s32.totalorder %s33, 1
      %p280 = scmp.ne.s32.totalorder %s275, %s277
      %p281 = scmp.eq.s32.totalorder %s33, 0
      %p282 = por %p280, %p281
      %p283 = scmp.ne.s32.totalorder %s275, %s277
      %p284 = scmp.eq.s32.totalorder %s38, 1
      %p285 = por %p283, %p284
      %p286 = scmp.ne.s32.totalorder %s277, %s278
      %p287 = scmp.eq.s32.totalorder %s38, 0
      %p288 = por %p286, %p287
      %p289 = scmp.ne.s32.totalorder %s277, %s278
      %p290 = scmp.eq.s32.totalorder %s39, 1
      %p291 = por %p289, %p290
      %p293 = scmp.ne.s32.totalorder %s278, %s292
      %p294 = scmp.eq.s32.totalorder %s39, 0
      %p295 = por %p293, %p294
      %s297 = sadd.s32 %s296, 1
      %p300 = scmp.eq.s32.totalorder %s33, 1
      %p301 = scmp.ne.s32.totalorder %s296, %s298
      %p302 = scmp.eq.s32.totalorder %s33, 0
      %p303 = por %p301, %p302
      %p304 = scmp.ne.s32.totalorder %s296, %s298
      %p305 = scmp.eq.s32.totalorder %s38, 1
      %p306 = por %p304, %p305
      %p307 = scmp.ne.s32.totalorder %s298, %s299
      %p308 = scmp.eq.s32.totalorder %s38, 0
      %p309 = por %p307, %p308
      %p310 = scmp.ne.s32.totalorder %s298, %s299
      %p311 = scmp.eq.s32.totalorder %s39, 1
      %p312 = por %p310, %p311
      %p314 = scmp.ne.s32.totalorder %s299, %s313
      %p315 = scmp.eq.s32.totalorder %s39, 0
      %p316 = por %p314, %p315
      %s317 = ssub.s32 %s40, %s52
      %s318 = ssub.s32 %s41, %s48
      %s319 = sor.u32 %s317, %s318
      %p320 = scmp.eq.s32.totalorder %s319, 0
      %s322 = sadd.s32 %s321, 1
      %s323 = scalar_select %p320, %s321, %s322
      %p326 = pneg %p320
      %p327 = scmp.eq.s32.totalorder %s33, 1
      %p328 = por %p326, %p327
      %p329 = scmp.ne.s32.totalorder %s321, %s324
      %p330 = scmp.eq.s32.totalorder %s33, 0
      %p331 = por %p329, %p330
      %p332 = scmp.ne.s32.totalorder %s321, %s324
      %p333 = scmp.eq.s32.totalorder %s38, 1
      %p334 = por %p332, %p333
      %p335 = scmp.ne.s32.totalorder %s324, %s325
      %p336 = scmp.eq.s32.totalorder %s38, 0
      %p337 = por %p335, %p336
      %p338 = scmp.ne.s32.totalorder %s324, %s325
      %p339 = scmp.eq.s32.totalorder %s39, 1
      %p340 = por %p338, %p339
      %p342 = scmp.ne.s32.totalorder %s325, %s341
      %p343 = scmp.eq.s32.totalorder %s39, 0
      %p344 = por %p342, %p343
      %s345 = ssub.s32 %s40, %s52
      %p346 = scmp.eq.s32.totalorder %s345, 0
      %s348 = sadd.s32 %s347, 1
      %s349 = scalar_select %p346, %s347, %s348
      %p352 = pneg %p346
      %p353 = scmp.eq.s32.totalorder %s33, 1
      %p354 = por %p352, %p353
      %p355 = scmp.ne.s32.totalorder %s347, %s350
      %p356 = scmp.eq.s32.totalorder %s33, 0
      %p357 = por %p355, %p356
      %p358 = scmp.ne.s32.totalorder %s347, %s350
      %p359 = scmp.eq.s32.totalorder %s38, 1
      %p360 = por %p358, %p359
      %p361 = scmp.ne.s32.totalorder %s350, %s351
      %p362 = scmp.eq.s32.totalorder %s38, 0
      %p363 = por %p361, %p362
      %p364 = scmp.ne.s32.totalorder %s350, %s351
      %p365 = scmp.eq.s32.totalorder %s39, 1
      %p366 = por %p364, %p365
      %p368 = scmp.ne.s32.totalorder %s351, %s367
      %p369 = scmp.eq.s32.totalorder %s39, 0
      %p370 = por %p368, %p369
      %p371 = scmp.le.s32.totalorder 1, %s33
      %p372 = scmp.lt.s32.totalorder %s33, 3
      %p373 = pnand %p371, %p372
      %p374 = pneg %p373
      // Predicated region
      $region9: #{_sep_impl.1} parent=5 // pred_check
        _
      $region10: #{_sep_impl.1} parent=5 // pred_check_branch
        %376 = sbr.rel (%p373) target = $region12
      $region11: #{_sep_impl.1} parent=5 // pred_region
        %s377 = ssub.s32 %s33, 1
        // Predicated region
        $region13: #{_sep_impl.1} parent=11 // pred_check
          %p378 = pneg %p99
        $region14: #{_sep_impl.1} parent=11 // pred_check_branch
          %380 = sbr.rel (%p378) target = $region16
        $region15: #{_sep_impl.1} parent=11 // pred_region
          %s382 = ssub.s32 256, 256
          %383 = vsyncadd [#allocation9], %s382
          %s384 = smul.addr %s42, 128
          %s385 = scalar_lea.hbm %s1, %s384
          %s386 = sshll.u32 [#allocation8], 4
          %s387 = int_to_ptr.vmem [resolvable:$true] %s386
          %392 = dma.hbm_to_vmem [thread:$0]  %s385, 256, %s387, [#allocation9], 128, 128, 8
        $region16: #{_sep_impl.1} parent=11 // pred_fallthru
          _
        // Predicated region
        $region17: #{_sep_impl.1} parent=11 // pred_check
          %p393 = pneg %p120
        $region18: #{_sep_impl.1} parent=11 // pred_check_branch
          %395 = sbr.rel (%p393) target = $region20
        $region19: #{_sep_impl.1} parent=11 // pred_region
          %s397 = ssub.s32 6144, 6144
          %398 = vsyncadd [#allocation9], %s397
          %s399 = sshll.u32 [#allocation10], 4
          %s400 = int_to_ptr.vmem [resolvable:$true] %s399
          %405 = dma.hbm_to_vmem [thread:$0]  %s2, 6144, %s400, [#allocation9], 384, 384, 24
        $region20: #{_sep_impl.1} parent=11 // pred_fallthru
          _
        // Predicated region
        $region21: #{_sep_impl.1} parent=11 // pred_check
          %p406 = pneg %p141
        $region22: #{_sep_impl.1} parent=11 // pred_check_branch
          %408 = sbr.rel (%p406) target = $region24
        $region23: #{_sep_impl.1} parent=11 // pred_region
          %s410 = ssub.s32 6144, 6144
          %411 = vsyncadd [#allocation12], %s410
          %s412 = sshll.u32 [#allocation11], 4
          %s413 = int_to_ptr.vmem [resolvable:$true] %s412
          %418 = dma.hbm_to_vmem [thread:$0]  %s3, 6144, %s413, [#allocation12], 384, 384, 24
        $region24: #{_sep_impl.1} parent=11 // pred_fallthru
          _
        // Predicated region
        $region25: #{_sep_impl.1} parent=11 // pred_check
          %p419 = pneg %p162
        $region26: #{_sep_impl.1} parent=11 // pred_check_branch
          %421 = sbr.rel (%p419) target = $region28
        $region27: #{_sep_impl.1} parent=11 // pred_region
          %s423 = ssub.s32 48, 48
          %424 = vsyncadd [#allocation12], %s423
          %s426 = sshll.u32 [#allocation13], 4
          %s427 = int_to_ptr.vmem [resolvable:$true] %s426
          %429 = dma.hbm_to_vmem [thread:$0]  %s4, 48, %s427, [#allocation12]
        $region28: #{_sep_impl.1} parent=11 // pred_fallthru
          _
        // Predicated region
        $region29: #{_sep_impl.1} parent=11 // pred_check
          %p430 = pneg %p183
        $region30: #{_sep_impl.1} parent=11 // pred_check_branch
          %432 = sbr.rel (%p430) target = $region32
        $region31: #{_sep_impl.1} parent=11 // pred_region
          %s434 = ssub.s32 16, 16
          %435 = vsyncadd [#allocation15], %s434
          %s437 = sshll.u32 [#allocation14], 4
          %s438 = int_to_ptr.vmem [resolvable:$true] %s437
          %440 = dma.hbm_to_vmem [thread:$0]  %s5, 16, %s438, [#allocation15]
        $region32: #{_sep_impl.1} parent=11 // pred_fallthru
          _
        // Predicated region
        $region33: #{_sep_impl.1} parent=11 // pred_check
          %p441 = pneg %p204
        $region34: #{_sep_impl.1} parent=11 // pred_check_branch
          %443 = sbr.rel (%p441) target = $region36
        $region35: #{_sep_impl.1} parent=11 // pred_region
          %s445 = ssub.s32 6144, 6144
          %446 = vsyncadd [#allocation15], %s445
          %s447 = sshll.u32 [#allocation16], 4
          %s448 = int_to_ptr.vmem [resolvable:$true] %s447
          %453 = dma.hbm_to_vmem [thread:$0]  %s6, 6144, %s448, [#allocation15], 384, 384, 24
        $region36: #{_sep_impl.1} parent=11 // pred_fallthru
          _
        // Predicated region
        $region37: #{_sep_impl.1} parent=11 // pred_check
          %p454 = pneg %p225
        $region38: #{_sep_impl.1} parent=11 // pred_check_branch
          %456 = sbr.rel (%p454) target = $region40
        $region39: #{_sep_impl.1} parent=11 // pred_region
          %s458 = ssub.s32 6144, 6144
          %459 = vsyncadd [#allocation18], %s458
          %s460 = sshll.u32 [#allocation17], 4
          %s461 = int_to_ptr.vmem [resolvable:$true] %s460
          %466 = dma.hbm_to_vmem [thread:$0]  %s7, 6144, %s461, [#allocation18], 384, 384, 24
        $region40: #{_sep_impl.1} parent=11 // pred_fallthru
          _
        // Predicated region
        $region41: #{_sep_impl.1} parent=11 // pred_check
          %p467 = pneg %p246
        $region42: #{_sep_impl.1} parent=11 // pred_check_branch
          %469 = sbr.rel (%p467) target = $region44
        $region43: #{_sep_impl.1} parent=11 // pred_region
          %s471 = ssub.s32 48, 48
          %472 = vsyncadd [#allocation18], %s471
          %s474 = sshll.u32 [#allocation19], 4
          %s475 = int_to_ptr.vmem [resolvable:$true] %s474
          %477 = dma.hbm_to_vmem [thread:$0]  %s8, 48, %s475, [#allocation18]
        $region44: #{_sep_impl.1} parent=11 // pred_fallthru
          _
        // Predicated region
        $region45: #{_sep_impl.1} parent=11 // pred_check
          %p478 = pneg %p267
        $region46: #{_sep_impl.1} parent=11 // pred_check_branch
          %480 = sbr.rel (%p478) target = $region48
        $region47: #{_sep_impl.1} parent=11 // pred_region
          %s482 = ssub.s32 16, 16
          %483 = vsyncadd [#allocation21], %s482
          %s485 = sshll.u32 [#allocation20], 4
          %s486 = int_to_ptr.vmem [resolvable:$true] %s485
          %488 = dma.hbm_to_vmem [thread:$0]  %s9, 16, %s486, [#allocation21]
        $region48: #{_sep_impl.1} parent=11 // pred_fallthru
          _
        // Predicated region
        $region49: #{_sep_impl.1} parent=11 // pred_check
          %p489 = pneg %p288
        $region50: #{_sep_impl.1} parent=11 // pred_check_branch
          %491 = sbr.rel (%p489) target = $region52
        $region51: #{_sep_impl.1} parent=11 // pred_region
          %s493 = ssub.s32 2048, 2048
          %494 = vsyncadd [#allocation21], %s493
          %s495 = sshll.u32 [#allocation22], 4
          %s496 = int_to_ptr.vmem [resolvable:$true] %s495
          %501 = dma.hbm_to_vmem [thread:$0]  %s10, 2048, %s496, [#allocation21], 128, 128, 8
        $region52: #{_sep_impl.1} parent=11 // pred_fallthru
          _
        // Predicated region
        $region53: #{_sep_impl.1} parent=11 // pred_check
          %p502 = pneg %p309
        $region54: #{_sep_impl.1} parent=11 // pred_check_branch
          %504 = sbr.rel (%p502) target = $region56
        $region55: #{_sep_impl.1} parent=11 // pred_region
          %s506 = ssub.s32 16, 16
          %507 = vsyncadd [#allocation24], %s506
          %s509 = sshll.u32 [#allocation23], 4
          %s510 = int_to_ptr.vmem [resolvable:$true] %s509
          %512 = dma.hbm_to_vmem [thread:$0]  %s11, 16, %s510, [#allocation24]
        $region56: #{_sep_impl.1} parent=11 // pred_fallthru
          _
      $region12: #{_sep_impl.1} parent=5 // pred_fallthru
        _
      %p513 = scmp.lt.s32.totalorder %s33, 2
      // Predicated region
      $region57: #{_sep_impl.1} parent=5 // pred_check
        %p514 = pneg %p513
      $region58: #{_sep_impl.1} parent=5 // pred_check_branch
        %516 = sbr.rel (%p514) target = $region60
      $region59: #{_sep_impl.1} parent=5 // pred_region
        // Predicated region
        $region61: #{_sep_impl.1} parent=59 // pred_check
          %p517 = pneg %p67
        $region62: #{_sep_impl.1} parent=59 // pred_check_branch
          %519 = sbr.rel (%p517) target = $region64
        $region63: #{_sep_impl.1} parent=59 // pred_region
          %s520 = sand.u32 %s57, 1
          %s521 = scalar_lea.sflag [#allocation6], %s520
          %s522 = sand.u32 %s57, 1
          %s523 = smul.addr %s522, 64
          %s524 = scalar_lea.vmem [#allocation5], %s523
          %s525 = smul.u32 8, %s41
          %s527 = ssub.s32 1024, 1024
          %528 = vsyncadd %s521, %s527
          %s529 = smul.addr %s40, 16
          %s530 = sadd.s32 %s525, %s529
          %s531 = smul.addr %s530, 128
          %s532 = scalar_lea.hbm %s0, %s531
          %s533 = sshll.u32 %s524, 4
          %s534 = int_to_ptr.vmem [resolvable:$true] %s533
          %539 = dma.hbm_to_vmem [thread:$0]  %s532, 1024, %s534, %s521, 128, 128, 8
        $region64: #{_sep_impl.1} parent=59 // pred_fallthru
          _
      $region60: #{_sep_impl.1} parent=5 // pred_fallthru
        _
      %p540 = scmp.le.s32.totalorder 1, %s33
      %p541 = scmp.lt.s32.totalorder %s33, 3
      %p542 = pnand %p540, %p541
      %p543 = pneg %p542
      // Predicated region
      $region65: #{_sep_impl.1} parent=5 // pred_check
        _
      $region66: #{_sep_impl.1} parent=5 // pred_check_branch
        %545 = sbr.rel (%p542) target = $region68
      $region67: #{_sep_impl.1} parent=5 // pred_region
        %s546 = ssub.s32 %s33, 1
        %s547 = sand.u32 %s60, 1
        %s548 = scalar_lea.sflag [#allocation6], %s547
        %s549 = sand.u32 %s60, 1
        %s550 = smul.addr %s549, 64
        %s551 = scalar_lea.vmem [#allocation5], %s550
        // Predicated region
        $region69: #{_sep_impl.1} parent=67 // pred_check
          %p552 = pneg %p73
        $region70: #{_sep_impl.1} parent=67 // pred_check_branch
          %554 = sbr.rel (%p552) target = $region72
        $region71: #{_sep_impl.1} parent=67 // pred_region
          %555 = dma.done %s548, 1024
        $region72: #{_sep_impl.1} parent=67 // pred_fallthru
          _
        // Predicated region
        $region73: #{_sep_impl.1} parent=67 // pred_check
          %p556 = pneg %p99
        $region74: #{_sep_impl.1} parent=67 // pred_check_branch
          %558 = sbr.rel (%p556) target = $region76
        $region75: #{_sep_impl.1} parent=67 // pred_region
          %559 = dma.done [#allocation9], 256
        $region76: #{_sep_impl.1} parent=67 // pred_fallthru
          _
        // Predicated region
        $region77: #{_sep_impl.1} parent=67 // pred_check
          %p560 = pneg %p120
        $region78: #{_sep_impl.1} parent=67 // pred_check_branch
          %562 = sbr.rel (%p560) target = $region80
        $region79: #{_sep_impl.1} parent=67 // pred_region
          %563 = dma.done [#allocation9], 6144
        $region80: #{_sep_impl.1} parent=67 // pred_fallthru
          _
        // Predicated region
        $region81: #{_sep_impl.1} parent=67 // pred_check
          %p564 = pneg %p141
        $region82: #{_sep_impl.1} parent=67 // pred_check_branch
          %566 = sbr.rel (%p564) target = $region84
        $region83: #{_sep_impl.1} parent=67 // pred_region
          %567 = dma.done [#allocation12], 6144
        $region84: #{_sep_impl.1} parent=67 // pred_fallthru
          _
        // Predicated region
        $region85: #{_sep_impl.1} parent=67 // pred_check
          %p568 = pneg %p162
        $region86: #{_sep_impl.1} parent=67 // pred_check_branch
          %570 = sbr.rel (%p568) target = $region88
        $region87: #{_sep_impl.1} parent=67 // pred_region
          %571 = dma.done [#allocation12], 48
        $region88: #{_sep_impl.1} parent=67 // pred_fallthru
          _
        // Predicated region
        $region89: #{_sep_impl.1} parent=67 // pred_check
          %p572 = pneg %p183
        $region90: #{_sep_impl.1} parent=67 // pred_check_branch
          %574 = sbr.rel (%p572) target = $region92
        $region91: #{_sep_impl.1} parent=67 // pred_region
          %575 = dma.done [#allocation15], 16
        $region92: #{_sep_impl.1} parent=67 // pred_fallthru
          _
        // Predicated region
        $region93: #{_sep_impl.1} parent=67 // pred_check
          %p576 = pneg %p204
        $region94: #{_sep_impl.1} parent=67 // pred_check_branch
          %578 = sbr.rel (%p576) target = $region96
        $region95: #{_sep_impl.1} parent=67 // pred_region
          %579 = dma.done [#allocation15], 6144
        $region96: #{_sep_impl.1} parent=67 // pred_fallthru
          _
        // Predicated region
        $region97: #{_sep_impl.1} parent=67 // pred_check
          %p580 = pneg %p225
        $region98: #{_sep_impl.1} parent=67 // pred_check_branch
          %582 = sbr.rel (%p580) target = $region100
        $region99: #{_sep_impl.1} parent=67 // pred_region
          %583 = dma.done [#allocation18], 6144
        $region100: #{_sep_impl.1} parent=67 // pred_fallthru
          _
        // Predicated region
        $region101: #{_sep_impl.1} parent=67 // pred_check
          %p584 = pneg %p246
        $region102: #{_sep_impl.1} parent=67 // pred_check_branch
          %586 = sbr.rel (%p584) target = $region104
        $region103: #{_sep_impl.1} parent=67 // pred_region
          %587 = dma.done [#allocation18], 48
        $region104: #{_sep_impl.1} parent=67 // pred_fallthru
          _
        // Predicated region
        $region105: #{_sep_impl.1} parent=67 // pred_check
          %p588 = pneg %p267
        $region106: #{_sep_impl.1} parent=67 // pred_check_branch
          %590 = sbr.rel (%p588) target = $region108
        $region107: #{_sep_impl.1} parent=67 // pred_region
          %591 = dma.done [#allocation21], 16
        $region108: #{_sep_impl.1} parent=67 // pred_fallthru
          _
        // Predicated region
        $region109: #{_sep_impl.1} parent=67 // pred_check
          %p592 = pneg %p288
        $region110: #{_sep_impl.1} parent=67 // pred_check_branch
          %594 = sbr.rel (%p592) target = $region112
        $region111: #{_sep_impl.1} parent=67 // pred_region
          %595 = dma.done [#allocation21], 2048
        $region112: #{_sep_impl.1} parent=67 // pred_fallthru
          _
        // Predicated region
        $region113: #{_sep_impl.1} parent=67 // pred_check
          %p596 = pneg %p309
        $region114: #{_sep_impl.1} parent=67 // pred_check_branch
          %598 = sbr.rel (%p596) target = $region116
        $region115: #{_sep_impl.1} parent=67 // pred_region
          %599 = dma.done [#allocation24], 16
        $region116: #{_sep_impl.1} parent=67 // pred_fallthru
          _
        %s600 = sand.u32 %s60, 1
        %s601 = scalar_lea.sflag [#allocation6], %s600
        %s602 = sand.u32 %s60, 1
        %s603 = smul.addr %s602, 64
        %s604 = scalar_lea.vmem [#allocation5], %s603
        %p605 = pneg %p73
        %p606 = pneg %p70
        %p607 = pneg %p99
        %p608 = pneg %p96
        %p609 = pneg %p120
        %p610 = pneg %p117
        %p611 = pneg %p141
        %p612 = pneg %p138
        %p613 = pneg %p162
        %p614 = pneg %p159
        %p615 = pneg %p183
        %p616 = pneg %p180
        %p617 = pneg %p204
        %p618 = pneg %p201
        %p619 = pneg %p225
        %p620 = pneg %p222
        %p621 = pneg %p246
        %p622 = pneg %p243
        %p623 = pneg %p267
        %p624 = pneg %p264
        %p625 = pneg %p288
        %p626 = pneg %p285
        %p627 = pneg %p309
        %p628 = pneg %p306
        %p629 = pneg %p337
        %p630 = pneg %p334
        %s631 = sand.u32 %s324, 1
        %s632 = scalar_lea.sflag [#allocation7], %s631
        %s633 = sand.u32 %s324, 1
        %s634 = smul.addr %s633, 64
        %s635 = scalar_lea.vmem [#allocation25], %s634
        %p636 = pneg %p363
        %p637 = pneg %p360
        %s638 = smul.u32 8, %s43
        %s639 = smul.u32 8, %s43
        %p640 = scmp.eq.s32.totalorder %s43, 0
        // Predicated region
        $region117: #{_sep_impl.1} parent=67 // pred_check
          %p641 = pneg %p640
        $region118: #{_sep_impl.1} parent=67 // pred_check_branch
          %643 = sbr.rel (%p641) target = $region120
        $region119: #{_sep_impl.1} parent=67 // pred_region
          %v644 = vld [vmem:[#allocation8] sm:$0xff]
          %v645 = vld [vmem:[#allocation8 + $0x8] sm:$0xff]
          %646 = vst [vmem:[#allocation4] sm:$0xff] %v644
          %647 = vst [vmem:[#allocation4 + $0x8] sm:$0xff] %v645
        $region120: #{_sep_impl.1} parent=67 // pred_fallthru
          _
        %v648 = vld [vmem:[%s551] sm:$0xff]
        %v649 = vld [vmem:[%s551 + $0x8] sm:$0xff]
        %v650 = vld [vmem:[%s551 + $0x10] sm:$0xff]
        %v651 = vld [vmem:[%s551 + $0x18] sm:$0xff]
        %v652 = vld [vmem:[%s551 + $0x20] sm:$0xff]
        %v653 = vld [vmem:[%s551 + $0x28] sm:$0xff]
        %v654 = vld [vmem:[%s551 + $0x30] sm:$0xff]
        %v655 = vld [vmem:[%s551 + $0x38] sm:$0xff]
        %v656 = vld [vmem:[#allocation10] sm:$0xff]
        %v657 = vld [vmem:[#allocation10 + $0x8] sm:$0xff]
        %v658 = vld [vmem:[#allocation10 + $0x10] sm:$0xff]
        %v659 = vld [vmem:[#allocation10 + $0x18] sm:$0xff]
        %v660 = vld [vmem:[#allocation10 + $0x20] sm:$0xff]
        %v661 = vld [vmem:[#allocation10 + $0x28] sm:$0xff]
        %v662 = vld [vmem:[#allocation10 + $0x30] sm:$0xff]
        %v663 = vld [vmem:[#allocation10 + $0x38] sm:$0xff]
        %v664 = vld [vmem:[#allocation10 + $0x40] sm:$0xff]
        %v665 = vld [vmem:[#allocation10 + $0x48] sm:$0xff]
        %v666 = vld [vmem:[#allocation10 + $0x50] sm:$0xff]
        %v667 = vld [vmem:[#allocation10 + $0x58] sm:$0xff]
        %v668 = vld [vmem:[#allocation10 + $0x60] sm:$0xff]
        %v669 = vld [vmem:[#allocation10 + $0x68] sm:$0xff]
        %v670 = vld [vmem:[#allocation10 + $0x70] sm:$0xff]
        %v671 = vld [vmem:[#allocation10 + $0x78] sm:$0xff]
        %v672 = vld [vmem:[#allocation10 + $0x80] sm:$0xff]
        %v673 = vld [vmem:[#allocation10 + $0x88] sm:$0xff]
        %v674 = vld [vmem:[#allocation10 + $0x90] sm:$0xff]
        %v675 = vld [vmem:[#allocation10 + $0x98] sm:$0xff]
        %v676 = vld [vmem:[#allocation10 + $0xa0] sm:$0xff]
        %v677 = vld [vmem:[#allocation10 + $0xa8] sm:$0xff]
        %v678 = vld [vmem:[#allocation10 + $0xb0] sm:$0xff]
        %v679 = vld [vmem:[#allocation10 + $0xb8] sm:$0xff]
        %v680 = vld [vmem:[#allocation10 + $0xc0] sm:$0xff]
        %v681 = vld [vmem:[#allocation10 + $0xc8] sm:$0xff]
        %v682 = vld [vmem:[#allocation10 + $0xd0] sm:$0xff]
        %v683 = vld [vmem:[#allocation10 + $0xd8] sm:$0xff]
        %v684 = vld [vmem:[#allocation10 + $0xe0] sm:$0xff]
        %v685 = vld [vmem:[#allocation10 + $0xe8] sm:$0xff]
        %v686 = vld [vmem:[#allocation10 + $0xf0] sm:$0xff]
        %v687 = vld [vmem:[#allocation10 + $0xf8] sm:$0xff]
        %v688 = vld [vmem:[#allocation10 + $0x100] sm:$0xff]
        %v689 = vld [vmem:[#allocation10 + $0x108] sm:$0xff]
        %v690 = vld [vmem:[#allocation10 + $0x110] sm:$0xff]
        %v691 = vld [vmem:[#allocation10 + $0x118] sm:$0xff]
        %v692 = vld [vmem:[#allocation10 + $0x120] sm:$0xff]
        %v693 = vld [vmem:[#allocation10 + $0x128] sm:$0xff]
        %v694 = vld [vmem:[#allocation10 + $0x130] sm:$0xff]
        %v695 = vld [vmem:[#allocation10 + $0x138] sm:$0xff]
        %v696 = vld [vmem:[#allocation10 + $0x140] sm:$0xff]
        %v697 = vld [vmem:[#allocation10 + $0x148] sm:$0xff]
        %v698 = vld [vmem:[#allocation10 + $0x150] sm:$0xff]
        %v699 = vld [vmem:[#allocation10 + $0x158] sm:$0xff]
        %v700 = vld [vmem:[#allocation10 + $0x160] sm:$0xff]
        %v701 = vld [vmem:[#allocation10 + $0x168] sm:$0xff]
        %v702 = vld [vmem:[#allocation10 + $0x170] sm:$0xff]
        %v703 = vld [vmem:[#allocation10 + $0x178] sm:$0xff]
        %v704 = vld [vmem:[#allocation13] sm:$0x7]
        %v706 = vlaneseq
        %v707 = vshrl.u32 %v706, 7
        %v708 = vsub.s32 0, %v707
        %v709 = vrot.slane %v704, %v708
        %v710 = vlaneseq
        %v711 = vshrl.u32 %v710, 7
        %v712 = vsub.s32 1, %v711
        %v713 = vrot.slane %v704, %v712
        %v714 = vlaneseq
        %v715 = vshrl.u32 %v714, 7
        %v716 = vsub.s32 2, %v715
        %v717 = vrot.slane %v704, %v716
        %721 = vmatprep.subr.mxu0 %v657
        %722 = vmatpush1.msra.mxu0 %v656
        %723 = vmatprep.subr.mxu0 %v660
        %724 = vmatpush1.msra.mxu0 %v659
        %725 = vmatprep.subr.mxu0 %v663
        %726 = vmatpush1.msra.mxu0 %v662
        %727 = vmatprep.subr.mxu0 %v666
        %728 = vmatpush1.msra.mxu0 %v665
        %729 = vmatprep.subr.mxu0 %v669
        %730 = vmatpush1.msra.mxu0 %v668
        %731 = vmatprep.subr.mxu0 %v672
        %732 = vmatpush1.msra.mxu0 %v671
        %733 = vmatprep.subr.mxu0 %v675
        %734 = vmatpush1.msra.mxu0 %v674
        %735 = vmatprep.subr.mxu0 %v678
        %736 = vmatpush1.msra.mxu0 %v677
        %737 = vmatprep.subr.mxu0 %v681
        %738 = vmatpush1.msra.mxu0 %v680
        %739 = vmatprep.subr.mxu0 %v684
        %740 = vmatpush1.msra.mxu0 %v683
        %741 = vmatprep.subr.mxu0 %v687
        %742 = vmatpush1.msra.mxu0 %v686
        %743 = vmatprep.subr.mxu0 %v690
        %744 = vmatpush1.msra.mxu0 %v689
        %745 = vmatprep.subr.mxu0 %v693
        %746 = vmatpush1.msra.mxu0 %v692
        %747 = vmatprep.subr.mxu0 %v696
        %748 = vmatpush1.msra.mxu0 %v695
        %749 = vmatprep.subr.mxu0 %v699
        %750 = vmatpush1.msra.mxu0 %v698
        %751 = vmatprep.subr.mxu0 %v702
        %752 = vmatpush1.msra.mxu0 %v701
        %753 = vmatprep.subr.mxu0 0.0
        %754 = vmatpush1.msra.mxu0 0.0
        %755 = vmatprep.subr.mxu0 0.0
        %756 = vmatpush1.msra.mxu0 0.0
        %757 = vmatprep.subr.mxu0 0.0
        %758 = vmatpush1.msra.mxu0 0.0
        %759 = vmatprep.subr.mxu0 0.0
        %760 = vmatpush1.msra.mxu0 0.0
        %761 = vmatprep.subr.mxu0 0.0
        %762 = vmatpush1.msra.mxu0 0.0
        %763 = vmatprep.subr.mxu0 0.0
        %764 = vmatpush1.msra.mxu0 0.0
        %765 = vmatprep.subr.mxu0 0.0
        %766 = vmatpush1.msra.mxu0 0.0
        %767 = vmatprep.subr.mxu0 0.0
        %768 = vmatpush1.msra.mxu0 0.0
        %769 = vmatprep.subr.mxu0 0.0
        %770 = vmatpush1.msra.mxu0 0.0
        %771 = vmatprep.subr.mxu0 0.0
        %772 = vmatpush1.msra.mxu0 0.0
        %773 = vmatprep.subr.mxu0 0.0
        %774 = vmatpush1.msra.mxu0 0.0
        %775 = vmatprep.subr.mxu0 0.0
        %776 = vmatpush1.msra.mxu0 0.0
        %777 = vmatprep.subr.mxu0 0.0
        %778 = vmatpush1.msra.mxu0 0.0
        %779 = vmatprep.subr.mxu0 0.0
        %780 = vmatpush1.msra.mxu0 0.0
        %781 = vmatprep.subr.mxu0 0.0
        %782 = vmatpush1.msra.mxu0 0.0
        %783 = vmatprep.subr.mxu0 0.0
        %784 = vmatpush1.msra.mxu0 0.0
        %785 = vmatprep.mubr.f32.mxu0 0.0
        %786 = vmatmul.mubr.f32.gmra.mrb[0].mxu0 %v648
        %v787 = vpop.f32.mrb[0].mxu0
        %v788 = vadd.f32 %v709, %v787
        %v789 = vpop.f32.mrb[0].mxu0
        %v790 = vadd.f32 %v713, %v789
        %791 = vmatprep.mubr.f32.mxu0 0.0
        %792 = vmatmul.mubr.f32.gmra.mrb[0].mxu0 %v649
        %v793 = vpop.f32.mrb[0].mxu0
        %v794 = vadd.f32 %v709, %v793
        %v795 = vpop.f32.mrb[0].mxu0
        %v796 = vadd.f32 %v713, %v795
        %797 = vmatprep.mubr.f32.mxu0 0.0
        %798 = vmatmul.mubr.f32.gmra.mrb[0].mxu0 %v650
        %v799 = vpop.f32.mrb[0].mxu0
        %v800 = vadd.f32 %v709, %v799
        %v801 = vpop.f32.mrb[0].mxu0
        %v802 = vadd.f32 %v713, %v801
        %803 = vmatprep.mubr.f32.mxu0 0.0
        %804 = vmatmul.mubr.f32.gmra.mrb[0].mxu0 %v651
        %v805 = vpop.f32.mrb[0].mxu0
        %v806 = vadd.f32 %v709, %v805
        %v807 = vpop.f32.mrb[0].mxu0
        %v808 = vadd.f32 %v713, %v807
        %809 = vmatprep.mubr.f32.mxu0 0.0
        %810 = vmatmul.mubr.f32.gmra.mrb[0].mxu0 %v652
        %v811 = vpop.f32.mrb[0].mxu0
        %v812 = vadd.f32 %v709, %v811
        %v813 = vpop.f32.mrb[0].mxu0
        %v814 = vadd.f32 %v713, %v813
        %815 = vmatprep.mubr.f32.mxu0 0.0
        %816 = vmatmul.mubr.f32.gmra.mrb[0].mxu0 %v653
        %v817 = vpop.f32.mrb[0].mxu0
        %v818 = vadd.f32 %v709, %v817
        %v819 = vpop.f32.mrb[0].mxu0
        %v820 = vadd.f32 %v713, %v819
        %821 = vmatprep.mubr.f32.mxu0 0.0
        %822 = vmatmul.mubr.f32.gmra.mrb[0].mxu0 %v654
        %v823 = vpop.f32.mrb[0].mxu0
        %v824 = vadd.f32 %v709, %v823
        %v825 = vpop.f32.mrb[0].mxu0
        %v826 = vadd.f32 %v713, %v825
        %827 = vmatprep.mubr.f32.mxu0 0.0
        %828 = vmatmul.mubr.f32.gmra.mrb[0].mxu0 %v655
        %v829 = vpop.f32.mrb[0].mxu0
        %v830 = vadd.f32 %v709, %v829
        %v831 = vpop.f32.mrb[0].mxu0
        %v832 = vadd.f32 %v713, %v831
        %833 = vdwg.mxu0
        %834 = vmatprep.subr.mxu0 0.0
        %835 = vmatpush1.msra.mxu0 %v658
        %836 = vmatprep.subr.mxu0 0.0
        %837 = vmatpush1.msra.mxu0 %v661
        %838 = vmatprep.subr.mxu0 0.0
        %839 = vmatpush1.msra.mxu0 %v664
        %840 = vmatprep.subr.mxu0 0.0
        %841 = vmatpush1.msra.mxu0 %v667
        %842 = vmatprep.subr.mxu0 0.0
        %843 = vmatpush1.msra.mxu0 %v670
        %844 = vmatprep.subr.mxu0 0.0
        %845 = vmatpush1.msra.mxu0 %v673
        %846 = vmatprep.subr.mxu0 0.0
        %847 = vmatpush1.msra.mxu0 %v676
        %848 = vmatprep.subr.mxu0 0.0
        %849 = vmatpush1.msra.mxu0 %v679
        %850 = vmatprep.subr.mxu0 0.0
        %851 = vmatpush1.msra.mxu0 %v682
        %852 = vmatprep.subr.mxu0 0.0
        %853 = vmatpush1.msra.mxu0 %v685
        %854 = vmatprep.subr.mxu0 0.0
        %855 = vmatpush1.msra.mxu0 %v688
        %856 = vmatprep.subr.mxu0 0.0
        %857 = vmatpush1.msra.mxu0 %v691
        %858 = vmatprep.subr.mxu0 0.0
        %859 = vmatpush1.msra.mxu0 %v694
        %860 = vmatprep.subr.mxu0 0.0
        %861 = vmatpush1.msra.mxu0 %v697
        %862 = vmatprep.subr.mxu0 0.0
        %863 = vmatpush1.msra.mxu0 %v700
        %864 = vmatprep.subr.mxu0 0.0
        %865 = vmatpush1.msra.mxu0 %v703
        %866 = vmatprep.subr.mxu0 0.0
        %867 = vmatpush1.msra.mxu0 0.0
        %868 = vmatprep.subr.mxu0 0.0
        %869 = vmatpush1.msra.mxu0 0.0
        %870 = vmatprep.subr.mxu0 0.0
        %871 = vmatpush1.msra.mxu0 0.0
        %872 = vmatprep.subr.mxu0 0.0
        %873 = vmatpush1.msra.mxu0 0.0
        %874 = vmatprep.subr.mxu0 0.0
        %875 = vmatpush1.msra.mxu0 0.0
        %876 = vmatprep.subr.mxu0 0.0
        %877 = vmatpush1.msra.mxu0 0.0
        %878 = vmatprep.subr.mxu0 0.0
        %879 = vmatpush1.msra.mxu0 0.0
        %880 = vmatprep.subr.mxu0 0.0
        %881 = vmatpush1.msra.mxu0 0.0
        %882 = vmatprep.subr.mxu0 0.0
        %883 = vmatpush1.msra.mxu0 0.0
        %884 = vmatprep.subr.mxu0 0.0
        %885 = vmatpush1.msra.mxu0 0.0
        %886 = vmatprep.subr.mxu0 0.0
        %887 = vmatpush1.msra.mxu0 0.0
        %888 = vmatprep.subr.mxu0 0.0
        %889 = vmatpush1.msra.mxu0 0.0
        %890 = vmatprep.subr.mxu0 0.0
        %891 = vmatpush1.msra.mxu0 0.0
        %892 = vmatprep.subr.mxu0 0.0
        %893 = vmatpush1.msra.mxu0 0.0
        %894 = vmatprep.subr.mxu0 0.0
        %895 = vmatpush1.msra.mxu0 0.0
        %896 = vmatprep.subr.mxu0 0.0
        %897 = vmatpush1.msra.mxu0 0.0
        %898 = vmatprep.mubr.f32.mxu0 0.0
        %899 = vmatmul.mubr.f32.gmra.mrb[0].mxu0 %v648
        %v900 = vpop.f32.mrb[0].mxu0
        %v901 = vadd.f32 %v717, %v900
        %v902 = vpop.f32.mrb[0].mxu0
        %903 = vmatprep.mubr.f32.mxu0 0.0
        %904 = vmatmul.mubr.f32.gmra.mrb[0].mxu0 %v649
        %v905 = vpop.f32.mrb[0].mxu0
        %v906 = vadd.f32 %v717, %v905
        %v907 = vpop.f32.mrb[0].mxu0
        %908 = vmatprep.mubr.f32.mxu0 0.0
        %909 = vmatmul.mubr.f32.gmra.mrb[0].mxu0 %v650
        %v910 = vpop.f32.mrb[0].mxu0
        %v911 = vadd.f32 %v717, %v910
        %v912 = vpop.f32.mrb[0].mxu0
        %913 = vmatprep.mubr.f32.mxu0 0.0
        %914 = vmatmul.mubr.f32.gmra.mrb[0].mxu0 %v651
        %v915 = vpop.f32.mrb[0].mxu0
        %v916 = vadd.f32 %v717, %v915
        %v917 = vpop.f32.mrb[0].mxu0
        %918 = vmatprep.mubr.f32.mxu0 0.0
        %919 = vmatmul.mubr.f32.gmra.mrb[0].mxu0 %v652
        %v920 = vpop.f32.mrb[0].mxu0
        %v921 = vadd.f32 %v717, %v920
        %v922 = vpop.f32.mrb[0].mxu0
        %923 = vmatprep.mubr.f32.mxu0 0.0
        %924 = vmatmul.mubr.f32.gmra.mrb[0].mxu0 %v653
        %v925 = vpop.f32.mrb[0].mxu0
        %v926 = vadd.f32 %v717, %v925
        %v927 = vpop.f32.mrb[0].mxu0
        %928 = vmatprep.mubr.f32.mxu0 0.0
        %929 = vmatmul.mubr.f32.gmra.mrb[0].mxu0 %v654
        %v930 = vpop.f32.mrb[0].mxu0
        %v931 = vadd.f32 %v717, %v930
        %v932 = vpop.f32.mrb[0].mxu0
        %933 = vmatprep.mubr.f32.mxu0 0.0
        %934 = vmatmul.mubr.f32.gmra.mrb[0].mxu0 %v655
        %v935 = vpop.f32.mrb[0].mxu0
        %v936 = vadd.f32 %v717, %v935
        %v937 = vpop.f32.mrb[0].mxu0
        %938 = vdwg.mxu0
        %939 = vst [vmem:[#allocation2] sm:$0xff] %v788
        %940 = vst [vmem:[#allocation2 + $0x8] sm:$0xff] %v790
        %941 = vst [vmem:[#allocation2 + $0x10] sm:$0xff] %v901
        %942 = vst [vmem:[#allocation2 + $0x18] sm:$0xff] %v794
        %943 = vst [vmem:[#allocation2 + $0x20] sm:$0xff] %v796
        %944 = vst [vmem:[#allocation2 + $0x28] sm:$0xff] %v906
        %945 = vst [vmem:[#allocation2 + $0x30] sm:$0xff] %v800
        %946 = vst [vmem:[#allocation2 + $0x38] sm:$0xff] %v802
        %947 = vst [vmem:[#allocation2 + $0x40] sm:$0xff] %v911
        %948 = vst [vmem:[#allocation2 + $0x48] sm:$0xff] %v806
        %949 = vst [vmem:[#allocation2 + $0x50] sm:$0xff] %v808
        %950 = vst [vmem:[#allocation2 + $0x58] sm:$0xff] %v916
        %951 = vst [vmem:[#allocation2 + $0x60] sm:$0xff] %v812
        %952 = vst [vmem:[#allocation2 + $0x68] sm:$0xff] %v814
        %953 = vst [vmem:[#allocation2 + $0x70] sm:$0xff] %v921
        %954 = vst [vmem:[#allocation2 + $0x78] sm:$0xff] %v818
        %955 = vst [vmem:[#allocation2 + $0x80] sm:$0xff] %v820
        %956 = vst [vmem:[#allocation2 + $0x88] sm:$0xff] %v926
        %957 = vst [vmem:[#allocation2 + $0x90] sm:$0xff] %v824
        %958 = vst [vmem:[#allocation2 + $0x98] sm:$0xff] %v826
        %959 = vst [vmem:[#allocation2 + $0xa0] sm:$0xff] %v931
        %960 = vst [vmem:[#allocation2 + $0xa8] sm:$0xff] %v830
        %961 = vst [vmem:[#allocation2 + $0xb0] sm:$0xff] %v832
        %962 = vst [vmem:[#allocation2 + $0xb8] sm:$0xff] %v936
        %v963 = vld [vmem:[#allocation11] sm:$0xff]
        %v964 = vld [vmem:[#allocation11 + $0x8] sm:$0xff]
        %v965 = vld [vmem:[#allocation11 + $0x10] sm:$0xff]
        %v966 = vld [vmem:[#allocation11 + $0x18] sm:$0xff]
        %v967 = vld [vmem:[#allocation11 + $0x20] sm:$0xff]
        %v968 = vld [vmem:[#allocation11 + $0x28] sm:$0xff]
        %v969 = vld [vmem:[#allocation11 + $0x30] sm:$0xff]
        %v970 = vld [vmem:[#allocation11 + $0x38] sm:$0xff]
        %v971 = vld [vmem:[#allocation11 + $0x40] sm:$0xff]
        %v972 = vld [vmem:[#allocation11 + $0x48] sm:$0xff]
        %v973 = vld [vmem:[#allocation11 + $0x50] sm:$0xff]
        %v974 = vld [vmem:[#allocation11 + $0x58] sm:$0xff]
        %v975 = vld [vmem:[#allocation11 + $0x60] sm:$0xff]
        %v976 = vld [vmem:[#allocation11 + $0x68] sm:$0xff]
        %v977 = vld [vmem:[#allocation11 + $0x70] sm:$0xff]
        %v978 = vld [vmem:[#allocation11 + $0x78] sm:$0xff]
        %v979 = vld [vmem:[#allocation11 + $0x80] sm:$0xff]
        %v980 = vld [vmem:[#allocation11 + $0x88] sm:$0xff]
        %v981 = vld [vmem:[#allocation11 + $0x90] sm:$0xff]
        %v982 = vld [vmem:[#allocation11 + $0x98] sm:$0xff]
        %v983 = vld [vmem:[#allocation11 + $0xa0] sm:$0xff]
        %v984 = vld [vmem:[#allocation11 + $0xa8] sm:$0xff]
        %v985 = vld [vmem:[#allocation11 + $0xb0] sm:$0xff]
        %v986 = vld [vmem:[#allocation11 + $0xb8] sm:$0xff]
        %v987 = vld [vmem:[#allocation11 + $0xc0] sm:$0xff]
        %v988 = vld [vmem:[#allocation11 + $0xc8] sm:$0xff]
        %v989 = vld [vmem:[#allocation11 + $0xd0] sm:$0xff]
        %v990 = vld [vmem:[#allocation11 + $0xd8] sm:$0xff]
        %v991 = vld [vmem:[#allocation11 + $0xe0] sm:$0xff]
        %v992 = vld [vmem:[#allocation11 + $0xe8] sm:$0xff]
        %v993 = vld [vmem:[#allocation11 + $0xf0] sm:$0xff]
        %v994 = vld [vmem:[#allocation11 + $0xf8] sm:$0xff]
        %v995 = vld [vmem:[#allocation11 + $0x100] sm:$0xff]
        %v996 = vld [vmem:[#allocation11 + $0x108] sm:$0xff]
        %v997 = vld [vmem:[#allocation11 + $0x110] sm:$0xff]
        %v998 = vld [vmem:[#allocation11 + $0x118] sm:$0xff]
        %v999 = vld [vmem:[#allocation11 + $0x120] sm:$0xff]
        %v1000 = vld [vmem:[#allocation11 + $0x128] sm:$0xff]
        %v1001 = vld [vmem:[#allocation11 + $0x130] sm:$0xff]
        %v1002 = vld [vmem:[#allocation11 + $0x138] sm:$0xff]
        %v1003 = vld [vmem:[#allocation11 + $0x140] sm:$0xff]
        %v1004 = vld [vmem:[#allocation11 + $0x148] sm:$0xff]
        %v1005 = vld [vmem:[#allocation11 + $0x150] sm:$0xff]
        %v1006 = vld [vmem:[#allocation11 + $0x158] sm:$0xff]
        %v1007 = vld [vmem:[#allocation11 + $0x160] sm:$0xff]
        %v1008 = vld [vmem:[#allocation11 + $0x168] sm:$0xff]
        %v1009 = vld [vmem:[#allocation11 + $0x170] sm:$0xff]
        %v1010 = vld [vmem:[#allocation11 + $0x178] sm:$0xff]
        %v1011 = vld [vmem:[#allocation16] sm:$0xff]
        %v1012 = vld [vmem:[#allocation16 + $0x8] sm:$0xff]
        %v1013 = vld [vmem:[#allocation16 + $0x10] sm:$0xff]
        %v1014 = vld [vmem:[#allocation16 + $0x18] sm:$0xff]
        %v1015 = vld [vmem:[#allocation16 + $0x20] sm:$0xff]
        %v1016 = vld [vmem:[#allocation16 + $0x28] sm:$0xff]
        %v1017 = vld [vmem:[#allocation16 + $0x30] sm:$0xff]
        %v1018 = vld [vmem:[#allocation16 + $0x38] sm:$0xff]
        %v1019 = vld [vmem:[#allocation16 + $0x40] sm:$0xff]
        %v1020 = vld [vmem:[#allocation16 + $0x48] sm:$0xff]
        %v1021 = vld [vmem:[#allocation16 + $0x50] sm:$0xff]
        %v1022 = vld [vmem:[#allocation16 + $0x58] sm:$0xff]
        %v1023 = vld [vmem:[#allocation16 + $0x60] sm:$0xff]
        %v1024 = vld [vmem:[#allocation16 + $0x68] sm:$0xff]
        %v1025 = vld [vmem:[#allocation16 + $0x70] sm:$0xff]
        %v1026 = vld [vmem:[#allocation16 + $0x78] sm:$0xff]
        %v1027 = vld [vmem:[#allocation16 + $0x80] sm:$0xff]
        %v1028 = vld [vmem:[#allocation16 + $0x88] sm:$0xff]
        %v1029 = vld [vmem:[#allocation16 + $0x90] sm:$0xff]
        %v1030 = vld [vmem:[#allocation16 + $0x98] sm:$0xff]
        %v1031 = vld [vmem:[#allocation16 + $0xa0] sm:$0xff]
        %v1032 = vld [vmem:[#allocation16 + $0xa8] sm:$0xff]
        %v1033 = vld [vmem:[#allocation16 + $0xb0] sm:$0xff]
        %v1034 = vld [vmem:[#allocation16 + $0xb8] sm:$0xff]
        %v1035 = vld [vmem:[#allocation16 + $0xc0] sm:$0xff]
        %v1036 = vld [vmem:[#allocation16 + $0xc8] sm:$0xff]
        %v1037 = vld [vmem:[#allocation16 + $0xd0] sm:$0xff]
        %v1038 = vld [vmem:[#allocation16 + $0xd8] sm:$0xff]
        %v1039 = vld [vmem:[#allocation16 + $0xe0] sm:$0xff]
        %v1040 = vld [vmem:[#allocation16 + $0xe8] sm:$0xff]
        %v1041 = vld [vmem:[#allocation16 + $0xf0] sm:$0xff]
        %v1042 = vld [vmem:[#allocation16 + $0xf8] sm:$0xff]
        %v1043 = vld [vmem:[#allocation16 + $0x100] sm:$0xff]
        %v1044 = vld [vmem:[#allocation16 + $0x108] sm:$0xff]
        %v1045 = vld [vmem:[#allocation16 + $0x110] sm:$0xff]
        %v1046 = vld [vmem:[#allocation16 + $0x118] sm:$0xff]
        %v1047 = vld [vmem:[#allocation16 + $0x120] sm:$0xff]
        %v1048 = vld [vmem:[#allocation16 + $0x128] sm:$0xff]
        %v1049 = vld [vmem:[#allocation16 + $0x130] sm:$0xff]
        %v1050 = vld [vmem:[#allocation16 + $0x138] sm:$0xff]
        %v1051 = vld [vmem:[#allocation16 + $0x140] sm:$0xff]
        %v1052 = vld [vmem:[#allocation16 + $0x148] sm:$0xff]
        %v1053 = vld [vmem:[#allocation16 + $0x150] sm:$0xff]
        %v1054 = vld [vmem:[#allocation16 + $0x158] sm:$0xff]
        %v1055 = vld [vmem:[#allocation16 + $0x160] sm:$0xff]
        %v1056 = vld [vmem:[#allocation16 + $0x168] sm:$0xff]
        %v1057 = vld [vmem:[#allocation16 + $0x170] sm:$0xff]
        %v1058 = vld [vmem:[#allocation16 + $0x178] sm:$0xff]
        %v1059 = vld [vmem:[#allocation17] sm:$0xff]
        %v1060 = vld [vmem:[#allocation17 + $0x8] sm:$0xff]
        %v1061 = vld [vmem:[#allocation17 + $0x10] sm:$0xff]
        %v1062 = vld [vmem:[#allocation17 + $0x18] sm:$0xff]
        %v1063 = vld [vmem:[#allocation17 + $0x20] sm:$0xff]
        %v1064 = vld [vmem:[#allocation17 + $0x28] sm:$0xff]
        %v1065 = vld [vmem:[#allocation17 + $0x30] sm:$0xff]
        %v1066 = vld [vmem:[#allocation17 + $0x38] sm:$0xff]
        %v1067 = vld [vmem:[#allocation17 + $0x40] sm:$0xff]
        %v1068 = vld [vmem:[#allocation17 + $0x48] sm:$0xff]
        %v1069 = vld [vmem:[#allocation17 + $0x50] sm:$0xff]
        %v1070 = vld [vmem:[#allocation17 + $0x58] sm:$0xff]
        %v1071 = vld [vmem:[#allocation17 + $0x60] sm:$0xff]
        %v1072 = vld [vmem:[#allocation17 + $0x68] sm:$0xff]
        %v1073 = vld [vmem:[#allocation17 + $0x70] sm:$0xff]
        %v1074 = vld [vmem:[#allocation17 + $0x78] sm:$0xff]
        %v1075 = vld [vmem:[#allocation17 + $0x80] sm:$0xff]
        %v1076 = vld [vmem:[#allocation17 + $0x88] sm:$0xff]
        %v1077 = vld [vmem:[#allocation17 + $0x90] sm:$0xff]
        %v1078 = vld [vmem:[#allocation17 + $0x98] sm:$0xff]
        %v1079 = vld [vmem:[#allocation17 + $0xa0] sm:$0xff]
        %v1080 = vld [vmem:[#allocation17 + $0xa8] sm:$0xff]
        %v1081 = vld [vmem:[#allocation17 + $0xb0] sm:$0xff]
        %v1082 = vld [vmem:[#allocation17 + $0xb8] sm:$0xff]
        %v1083 = vld [vmem:[#allocation17 + $0xc0] sm:$0xff]
        %v1084 = vld [vmem:[#allocation17 + $0xc8] sm:$0xff]
        %v1085 = vld [vmem:[#allocation17 + $0xd0] sm:$0xff]
        %v1086 = vld [vmem:[#allocation17 + $0xd8] sm:$0xff]
        %v1087 = vld [vmem:[#allocation17 + $0xe0] sm:$0xff]
        %v1088 = vld [vmem:[#allocation17 + $0xe8] sm:$0xff]
        %v1089 = vld [vmem:[#allocation17 + $0xf0] sm:$0xff]
        %v1090 = vld [vmem:[#allocation17 + $0xf8] sm:$0xff]
        %v1091 = vld [vmem:[#allocation17 + $0x100] sm:$0xff]
        %v1092 = vld [vmem:[#allocation17 + $0x108] sm:$0xff]
        %v1093 = vld [vmem:[#allocation17 + $0x110] sm:$0xff]
        %v1094 = vld [vmem:[#allocation17 + $0x118] sm:$0xff]
        %v1095 = vld [vmem:[#allocation17 + $0x120] sm:$0xff]
        %v1096 = vld [vmem:[#allocation17 + $0x128] sm:$0xff]
        %v1097 = vld [vmem:[#allocation17 + $0x130] sm:$0xff]
        %v1098 = vld [vmem:[#allocation17 + $0x138] sm:$0xff]
        %v1099 = vld [vmem:[#allocation17 + $0x140] sm:$0xff]
        %v1100 = vld [vmem:[#allocation17 + $0x148] sm:$0xff]
        %v1101 = vld [vmem:[#allocation17 + $0x150] sm:$0xff]
        %v1102 = vld [vmem:[#allocation17 + $0x158] sm:$0xff]
        %v1103 = vld [vmem:[#allocation17 + $0x160] sm:$0xff]
        %v1104 = vld [vmem:[#allocation17 + $0x168] sm:$0xff]
        %v1105 = vld [vmem:[#allocation17 + $0x170] sm:$0xff]
        %v1106 = vld [vmem:[#allocation17 + $0x178] sm:$0xff]
        %v1107 = vld [vmem:[#allocation19] sm:$0x7]
        %v1109 = vlaneseq
        %v1110 = vshrl.u32 %v1109, 7
        %v1111 = vsub.s32 0, %v1110
        %v1112 = vrot.slane %v1107, %v1111
        %v1113 = vlaneseq
        %v1114 = vshrl.u32 %v1113, 7
        %v1115 = vsub.s32 1, %v1114
        %v1116 = vrot.slane %v1107, %v1115
        %v1117 = vlaneseq
        %v1118 = vshrl.u32 %v1117, 7
        %v1119 = vsub.s32 2, %v1118
        %v1120 = vrot.slane %v1107, %v1119
        %v1124 = vld [vmem:[#allocation14] sm:$0x1]
        %v1126 = vlaneseq
        %v1127 = vshrl.u32 %v1126, 7
        %v1128 = vsub.s32 0, %v1127
        %v1129 = vrot.slane %v1124, %v1128
        %v1131 = vld [vmem:[#allocation20] sm:$0x1]
        %v1133 = vlaneseq
        %v1134 = vshrl.u32 %v1133, 7
        %v1135 = vsub.s32 0, %v1134
        %v1136 = vrot.slane %v1131, %v1135
        %v1138 = vld [vmem:[#allocation4] sm:$0xff]
        %s1139 = scalar_lea.vmem [#allocation4], 8
        %v1140 = vld [vmem:[%s1139] sm:$0xff]
        %s1141 = smul.u32 %s43, 8
        %s1142 = ssub.s32 12, %s1141
        %p1143 = scmp.lt.s32.totalorder %s1142, 8
        %s1144 = scalar_select %p1143, %s1142, 8
        // While loop
        $region121: #{_sep_impl.1} parent=67 // loop_pre_header
          _
        $region122: #{_sep_impl.1} parent=67 // loop_header
          %s1146 = sphi 0, %s1148
          %p1147 = scmp.ge.s32.totalorder %s1146, %s1144
          %v1151 = vphi %v1138, %v1321
          %v1152 = vphi %v1140, %v1625
        $region123: #{_sep_impl.1} parent=67 // loop_header_branch
          %1150 = sbr.rel (%p1147) target = $region127
        $region124: #{_sep_impl.1} parent=67 // loop_body
          %s1153 = smul.u32 %s1146, 3
          %s1154 = smul.addr %s1153, 8
          %s1155 = scalar_lea.vmem [#allocation2], %s1154
          %v1156 = vld [vmem:[%s1155] sm:$0xff]
          %v1157 = vld [vmem:[%s1155 + $0x8] sm:$0xff]
          %v1158 = vld [vmem:[%s1155 + $0x10] sm:$0xff]
          %1159 = vmatprep.subr.mxu0 %v964
          %1160 = vmatpush1.msra.mxu0 %v963
          %1161 = vmatprep.subr.mxu0 %v967
          %1162 = vmatpush1.msra.mxu0 %v966
          %1163 = vmatprep.subr.mxu0 %v970
          %1164 = vmatpush1.msra.mxu0 %v969
          %1165 = vmatprep.subr.mxu0 %v973
          %1166 = vmatpush1.msra.mxu0 %v972
          %1167 = vmatprep.subr.mxu0 %v976
          %1168 = vmatpush1.msra.mxu0 %v975
          %1169 = vmatprep.subr.mxu0 %v979
          %1170 = vmatpush1.msra.mxu0 %v978
          %1171 = vmatprep.subr.mxu0 %v982
          %1172 = vmatpush1.msra.mxu0 %v981
          %1173 = vmatprep.subr.mxu0 %v985
          %1174 = vmatpush1.msra.mxu0 %v984
          %1175 = vmatprep.subr.mxu0 %v988
          %1176 = vmatpush1.msra.mxu0 %v987
          %1177 = vmatprep.subr.mxu0 %v991
          %1178 = vmatpush1.msra.mxu0 %v990
          %1179 = vmatprep.subr.mxu0 %v994
          %1180 = vmatpush1.msra.mxu0 %v993
          %1181 = vmatprep.subr.mxu0 %v997
          %1182 = vmatpush1.msra.mxu0 %v996
          %1183 = vmatprep.subr.mxu0 %v1000
          %1184 = vmatpush1.msra.mxu0 %v999
          %1185 = vmatprep.subr.mxu0 %v1003
          %1186 = vmatpush1.msra.mxu0 %v1002
          %1187 = vmatprep.subr.mxu0 %v1006
          %1188 = vmatpush1.msra.mxu0 %v1005
          %1189 = vmatprep.subr.mxu0 %v1009
          %1190 = vmatpush1.msra.mxu0 %v1008
          %1191 = vmatprep.subr.mxu0 0.0
          %1192 = vmatpush1.msra.mxu0 0.0
          %1193 = vmatprep.subr.mxu0 0.0
          %1194 = vmatpush1.msra.mxu0 0.0
          %1195 = vmatprep.subr.mxu0 0.0
          %1196 = vmatpush1.msra.mxu0 0.0
          %1197 = vmatprep.subr.mxu0 0.0
          %1198 = vmatpush1.msra.mxu0 0.0
          %1199 = vmatprep.subr.mxu0 0.0
          %1200 = vmatpush1.msra.mxu0 0.0
          %1201 = vmatprep.subr.mxu0 0.0
          %1202 = vmatpush1.msra.mxu0 0.0
          %1203 = vmatprep.subr.mxu0 0.0
          %1204 = vmatpush1.msra.mxu0 0.0
          %1205 = vmatprep.subr.mxu0 0.0
          %1206 = vmatpush1.msra.mxu0 0.0
          %1207 = vmatprep.subr.mxu0 0.0
          %1208 = vmatpush1.msra.mxu0 0.0
          %1209 = vmatprep.subr.mxu0 0.0
          %1210 = vmatpush1.msra.mxu0 0.0
          %1211 = vmatprep.subr.mxu0 0.0
          %1212 = vmatpush1.msra.mxu0 0.0
          %1213 = vmatprep.subr.mxu0 0.0
          %1214 = vmatpush1.msra.mxu0 0.0
          %1215 = vmatprep.subr.mxu0 0.0
          %1216 = vmatpush1.msra.mxu0 0.0
          %1217 = vmatprep.subr.mxu0 0.0
          %1218 = vmatpush1.msra.mxu0 0.0
          %1219 = vmatprep.subr.mxu0 0.0
          %1220 = vmatpush1.msra.mxu0 0.0
          %1221 = vmatprep.subr.mxu0 0.0
          %1222 = vmatpush1.msra.mxu0 0.0
          %1223 = vmatprep.mubr.f32.mxu0 0.0
          %1224 = vmatmul.mubr.f32.gmra.mrb[0].mxu0 %v1151
          %v1225 = vpop.f32.mrb[0].mxu0
          %v1226 = vadd.f32 0.0, %v1225
          %v1227 = vpop.f32.mrb[0].mxu0
          %v1228 = vadd.f32 0.0, %v1227
          %1229 = vdwg.mxu0
          %1230 = vmatprep.subr.mxu0 0.0
          %1231 = vmatpush1.msra.mxu0 %v965
          %1232 = vmatprep.subr.mxu0 0.0
          %1233 = vmatpush1.msra.mxu0 %v968
          %1234 = vmatprep.subr.mxu0 0.0
          %1235 = vmatpush1.msra.mxu0 %v971
          %1236 = vmatprep.subr.mxu0 0.0
          %1237 = vmatpush1.msra.mxu0 %v974
          %1238 = vmatprep.subr.mxu0 0.0
          %1239 = vmatpush1.msra.mxu0 %v977
          %1240 = vmatprep.subr.mxu0 0.0
          %1241 = vmatpush1.msra.mxu0 %v980
          %1242 = vmatprep.subr.mxu0 0.0
          %1243 = vmatpush1.msra.mxu0 %v983
          %1244 = vmatprep.subr.mxu0 0.0
          %1245 = vmatpush1.msra.mxu0 %v986
          %1246 = vmatprep.subr.mxu0 0.0
          %1247 = vmatpush1.msra.mxu0 %v989
          %1248 = vmatprep.subr.mxu0 0.0
          %1249 = vmatpush1.msra.mxu0 %v992
          %1250 = vmatprep.subr.mxu0 0.0
          %1251 = vmatpush1.msra.mxu0 %v995
          %1252 = vmatprep.subr.mxu0 0.0
          %1253 = vmatpush1.msra.mxu0 %v998
          %1254 = vmatprep.subr.mxu0 0.0
          %1255 = vmatpush1.msra.mxu0 %v1001
          %1256 = vmatprep.subr.mxu0 0.0
          %1257 = vmatpush1.msra.mxu0 %v1004
          %1258 = vmatprep.subr.mxu0 0.0
          %1259 = vmatpush1.msra.mxu0 %v1007
          %1260 = vmatprep.subr.mxu0 0.0
          %1261 = vmatpush1.msra.mxu0 %v1010
          %1262 = vmatprep.subr.mxu0 0.0
          %1263 = vmatpush1.msra.mxu0 0.0
          %1264 = vmatprep.subr.mxu0 0.0
          %1265 = vmatpush1.msra.mxu0 0.0
          %1266 = vmatprep.subr.mxu0 0.0
          %1267 = vmatpush1.msra.mxu0 0.0
          %1268 = vmatprep.subr.mxu0 0.0
          %1269 = vmatpush1.msra.mxu0 0.0
          %1270 = vmatprep.subr.mxu0 0.0
          %1271 = vmatpush1.msra.mxu0 0.0
          %1272 = vmatprep.subr.mxu0 0.0
          %1273 = vmatpush1.msra.mxu0 0.0
          %1274 = vmatprep.subr.mxu0 0.0
          %1275 = vmatpush1.msra.mxu0 0.0
          %1276 = vmatprep.subr.mxu0 0.0
          %1277 = vmatpush1.msra.mxu0 0.0
          %1278 = vmatprep.subr.mxu0 0.0
          %1279 = vmatpush1.msra.mxu0 0.0
          %1280 = vmatprep.subr.mxu0 0.0
          %1281 = vmatpush1.msra.mxu0 0.0
          %1282 = vmatprep.subr.mxu0 0.0
          %1283 = vmatpush1.msra.mxu0 0.0
          %1284 = vmatprep.subr.mxu0 0.0
          %1285 = vmatpush1.msra.mxu0 0.0
          %1286 = vmatprep.subr.mxu0 0.0
          %1287 = vmatpush1.msra.mxu0 0.0
          %1288 = vmatprep.subr.mxu0 0.0
          %1289 = vmatpush1.msra.mxu0 0.0
          %1290 = vmatprep.subr.mxu0 0.0
          %1291 = vmatpush1.msra.mxu0 0.0
          %1292 = vmatprep.subr.mxu0 0.0
          %1293 = vmatpush1.msra.mxu0 0.0
          %1294 = vmatprep.mubr.f32.mxu0 0.0
          %1295 = vmatmul.mubr.f32.gmra.mrb[0].mxu0 %v1151
          %v1296 = vpop.f32.mrb[0].mxu0
          %v1297 = vadd.f32 0.0, %v1296
          %v1298 = vpop.f32.mrb[0].mxu0
          %1299 = vdwg.mxu0
          %v1300 = vadd.f32 %v1156, %v1226
          %v1301 = vadd.f32 %v1157, %v1228
          %v1302 = vxor.u32 %v1300, 2147483648
          %v1303 = vxor.u32 %v1301, 2147483648
          %v1304 = vmul.f32 %v1302, 1.442695
          %v1305 = vpow.pop %v1304
          %v1306 = vmul.f32 %v1303, 1.442695
          %v1307 = vpow.pop %v1306
          %v1308 = vadd.f32 %v1305, 1.0
          %v1309 = vadd.f32 %v1307, 1.0
          %v1310 = vrcp.pop %v1308
          %v1311 = vmul.f32 1.0, %v1310
          %v1312 = vrcp.pop %v1309
          %v1313 = vmul.f32 1.0, %v1312
          %v1314 = vadd.f32 %v1297, %v1129
          %v1315 = vmul.f32 %v1311, %v1314
          %v1316 = vadd.f32 %v1158, %v1315
          %v1317 = vtanh.pop %v1316
          %v1318 = vsub.f32 1.0, %v1313
          %v1319 = vmul.f32 %v1318, %v1317
          %v1320 = vmul.f32 %v1313, %v1151
          %v1321 = vadd.f32 %v1319, %v1320
          %1322 = vmatprep.subr.mxu0 %v1012
          %1323 = vmatpush1.msra.mxu0 %v1011
          %1324 = vmatprep.subr.mxu0 %v1015
          %1325 = vmatpush1.msra.mxu0 %v1014
          %1326 = vmatprep.subr.mxu0 %v1018
          %1327 = vmatpush1.msra.mxu0 %v1017
          %1328 = vmatprep.subr.mxu0 %v1021
          %1329 = vmatpush1.msra.mxu0 %v1020
          %1330 = vmatprep.subr.mxu0 %v1024
          %1331 = vmatpush1.msra.mxu0 %v1023
          %1332 = vmatprep.subr.mxu0 %v1027
          %1333 = vmatpush1.msra.mxu0 %v1026
          %1334 = vmatprep.subr.mxu0 %v1030
          %1335 = vmatpush1.msra.mxu0 %v1029
          %1336 = vmatprep.subr.mxu0 %v1033
          %1337 = vmatpush1.msra.mxu0 %v1032
          %1338 = vmatprep.subr.mxu0 %v1036
          %1339 = vmatpush1.msra.mxu0 %v1035
          %1340 = vmatprep.subr.mxu0 %v1039
          %1341 = vmatpush1.msra.mxu0 %v1038
          %1342 = vmatprep.subr.mxu0 %v1042
          %1343 = vmatpush1.msra.mxu0 %v1041
          %1344 = vmatprep.subr.mxu0 %v1045
          %1345 = vmatpush1.msra.mxu0 %v1044
          %1346 = vmatprep.subr.mxu0 %v1048
          %1347 = vmatpush1.msra.mxu0 %v1047
          %1348 = vmatprep.subr.mxu0 %v1051
          %1349 = vmatpush1.msra.mxu0 %v1050
          %1350 = vmatprep.subr.mxu0 %v1054
          %1351 = vmatpush1.msra.mxu0 %v1053
          %1352 = vmatprep.subr.mxu0 %v1057
          %1353 = vmatpush1.msra.mxu0 %v1056
          %1354 = vmatprep.subr.mxu0 0.0
          %1355 = vmatpush1.msra.mxu0 0.0
          %1356 = vmatprep.subr.mxu0 0.0
          %1357 = vmatpush1.msra.mxu0 0.0
          %1358 = vmatprep.subr.mxu0 0.0
          %1359 = vmatpush1.msra.mxu0 0.0
          %1360 = vmatprep.subr.mxu0 0.0
          %1361 = vmatpush1.msra.mxu0 0.0
          %1362 = vmatprep.subr.mxu0 0.0
          %1363 = vmatpush1.msra.mxu0 0.0
          %1364 = vmatprep.subr.mxu0 0.0
          %1365 = vmatpush1.msra.mxu0 0.0
          %1366 = vmatprep.subr.mxu0 0.0
          %1367 = vmatpush1.msra.mxu0 0.0
          %1368 = vmatprep.subr.mxu0 0.0
          %1369 = vmatpush1.msra.mxu0 0.0
          %1370 = vmatprep.subr.mxu0 0.0
          %1371 = vmatpush1.msra.mxu0 0.0
          %1372 = vmatprep.subr.mxu0 0.0
          %1373 = vmatpush1.msra.mxu0 0.0
          %1374 = vmatprep.subr.mxu0 0.0
          %1375 = vmatpush1.msra.mxu0 0.0
          %1376 = vmatprep.subr.mxu0 0.0
          %1377 = vmatpush1.msra.mxu0 0.0
          %1378 = vmatprep.subr.mxu0 0.0
          %1379 = vmatpush1.msra.mxu0 0.0
          %1380 = vmatprep.subr.mxu0 0.0
          %1381 = vmatpush1.msra.mxu0 0.0
          %1382 = vmatprep.subr.mxu0 0.0
          %1383 = vmatpush1.msra.mxu0 0.0
          %1384 = vmatprep.subr.mxu0 0.0
          %1385 = vmatpush1.msra.mxu0 0.0
          %1386 = vmatprep.mubr.f32.mxu0 0.0
          %1387 = vmatmul.mubr.f32.gmra.mrb[0].mxu0 %v1321
          %v1388 = vpop.f32.mrb[0].mxu0
          %v1389 = vadd.f32 %v1112, %v1388
          %v1390 = vpop.f32.mrb[0].mxu0
          %v1391 = vadd.f32 %v1116, %v1390
          %1392 = vdwg.mxu0
          %1393 = vmatprep.subr.mxu0 0.0
          %1394 = vmatpush1.msra.mxu0 %v1013
          %1395 = vmatprep.subr.mxu0 0.0
          %1396 = vmatpush1.msra.mxu0 %v1016
          %1397 = vmatprep.subr.mxu0 0.0
          %1398 = vmatpush1.msra.mxu0 %v1019
          %1399 = vmatprep.subr.mxu0 0.0
          %1400 = vmatpush1.msra.mxu0 %v1022
          %1401 = vmatprep.subr.mxu0 0.0
          %1402 = vmatpush1.msra.mxu0 %v1025
          %1403 = vmatprep.subr.mxu0 0.0
          %1404 = vmatpush1.msra.mxu0 %v1028
          %1405 = vmatprep.subr.mxu0 0.0
          %1406 = vmatpush1.msra.mxu0 %v1031
          %1407 = vmatprep.subr.mxu0 0.0
          %1408 = vmatpush1.msra.mxu0 %v1034
          %1409 = vmatprep.subr.mxu0 0.0
          %1410 = vmatpush1.msra.mxu0 %v1037
          %1411 = vmatprep.subr.mxu0 0.0
          %1412 = vmatpush1.msra.mxu0 %v1040
          %1413 = vmatprep.subr.mxu0 0.0
          %1414 = vmatpush1.msra.mxu0 %v1043
          %1415 = vmatprep.subr.mxu0 0.0
          %1416 = vmatpush1.msra.mxu0 %v1046
          %1417 = vmatprep.subr.mxu0 0.0
          %1418 = vmatpush1.msra.mxu0 %v1049
          %1419 = vmatprep.subr.mxu0 0.0
          %1420 = vmatpush1.msra.mxu0 %v1052
          %1421 = vmatprep.subr.mxu0 0.0
          %1422 = vmatpush1.msra.mxu0 %v1055
          %1423 = vmatprep.subr.mxu0 0.0
          %1424 = vmatpush1.msra.mxu0 %v1058
          %1425 = vmatprep.subr.mxu0 0.0
          %1426 = vmatpush1.msra.mxu0 0.0
          %1427 = vmatprep.subr.mxu0 0.0
          %1428 = vmatpush1.msra.mxu0 0.0
          %1429 = vmatprep.subr.mxu0 0.0
          %1430 = vmatpush1.msra.mxu0 0.0
          %1431 = vmatprep.subr.mxu0 0.0
          %1432 = vmatpush1.msra.mxu0 0.0
          %1433 = vmatprep.subr.mxu0 0.0
          %1434 = vmatpush1.msra.mxu0 0.0
          %1435 = vmatprep.subr.mxu0 0.0
          %1436 = vmatpush1.msra.mxu0 0.0
          %1437 = vmatprep.subr.mxu0 0.0
          %1438 = vmatpush1.msra.mxu0 0.0
          %1439 = vmatprep.subr.mxu0 0.0
          %1440 = vmatpush1.msra.mxu0 0.0
          %1441 = vmatprep.subr.mxu0 0.0
          %1442 = vmatpush1.msra.mxu0 0.0
          %1443 = vmatprep.subr.mxu0 0.0
          %1444 = vmatpush1.msra.mxu0 0.0
          %1445 = vmatprep.subr.mxu0 0.0
          %1446 = vmatpush1.msra.mxu0 0.0
          %1447 = vmatprep.subr.mxu0 0.0
          %1448 = vmatpush1.msra.mxu0 0.0
          %1449 = vmatprep.subr.mxu0 0.0
          %1450 = vmatpush1.msra.mxu0 0.0
          %1451 = vmatprep.subr.mxu0 0.0
          %1452 = vmatpush1.msra.mxu0 0.0
          %1453 = vmatprep.subr.mxu0 0.0
          %1454 = vmatpush1.msra.mxu0 0.0
          %1455 = vmatprep.subr.mxu0 0.0
          %1456 = vmatpush1.msra.mxu0 0.0
          %1457 = vmatprep.mubr.f32.mxu0 0.0
          %1458 = vmatmul.mubr.f32.gmra.mrb[0].mxu0 %v1321
          %v1459 = vpop.f32.mrb[0].mxu0
          %v1460 = vadd.f32 %v1120, %v1459
          %v1461 = vpop.f32.mrb[0].mxu0
          %1462 = vdwg.mxu0
          %1463 = vmatprep.subr.mxu0 %v1060
          %1464 = vmatpush1.msra.mxu0 %v1059
          %1465 = vmatprep.subr.mxu0 %v1063
          %1466 = vmatpush1.msra.mxu0 %v1062
          %1467 = vmatprep.subr.mxu0 %v1066
          %1468 = vmatpush1.msra.mxu0 %v1065
          %1469 = vmatprep.subr.mxu0 %v1069
          %1470 = vmatpush1.msra.mxu0 %v1068
          %1471 = vmatprep.subr.mxu0 %v1072
          %1472 = vmatpush1.msra.mxu0 %v1071
          %1473 = vmatprep.subr.mxu0 %v1075
          %1474 = vmatpush1.msra.mxu0 %v1074
          %1475 = vmatprep.subr.mxu0 %v1078
          %1476 = vmatpush1.msra.mxu0 %v1077
          %1477 = vmatprep.subr.mxu0 %v1081
          %1478 = vmatpush1.msra.mxu0 %v1080
          %1479 = vmatprep.subr.mxu0 %v1084
          %1480 = vmatpush1.msra.mxu0 %v1083
          %1481 = vmatprep.subr.mxu0 %v1087
          %1482 = vmatpush1.msra.mxu0 %v1086
          %1483 = vmatprep.subr.mxu0 %v1090
          %1484 = vmatpush1.msra.mxu0 %v1089
          %1485 = vmatprep.subr.mxu0 %v1093
          %1486 = vmatpush1.msra.mxu0 %v1092
          %1487 = vmatprep.subr.mxu0 %v1096
          %1488 = vmatpush1.msra.mxu0 %v1095
          %1489 = vmatprep.subr.mxu0 %v1099
          %1490 = vmatpush1.msra.mxu0 %v1098
          %1491 = vmatprep.subr.mxu0 %v1102
          %1492 = vmatpush1.msra.mxu0 %v1101
          %1493 = vmatprep.subr.mxu0 %v1105
          %1494 = vmatpush1.msra.mxu0 %v1104
          %1495 = vmatprep.subr.mxu0 0.0
          %1496 = vmatpush1.msra.mxu0 0.0
          %1497 = vmatprep.subr.mxu0 0.0
          %1498 = vmatpush1.msra.mxu0 0.0
          %1499 = vmatprep.subr.mxu0 0.0
          %1500 = vmatpush1.msra.mxu0 0.0
          %1501 = vmatprep.subr.mxu0 0.0
          %1502 = vmatpush1.msra.mxu0 0.0
          %1503 = vmatprep.subr.mxu0 0.0
          %1504 = vmatpush1.msra.mxu0 0.0
          %1505 = vmatprep.subr.mxu0 0.0
          %1506 = vmatpush1.msra.mxu0 0.0
          %1507 = vmatprep.subr.mxu0 0.0
          %1508 = vmatpush1.msra.mxu0 0.0
          %1509 = vmatprep.subr.mxu0 0.0
          %1510 = vmatpush1.msra.mxu0 0.0
          %1511 = vmatprep.subr.mxu0 0.0
          %1512 = vmatpush1.msra.mxu0 0.0
          %1513 = vmatprep.subr.mxu0 0.0
          %1514 = vmatpush1.msra.mxu0 0.0
          %1515 = vmatprep.subr.mxu0 0.0
          %1516 = vmatpush1.msra.mxu0 0.0
          %1517 = vmatprep.subr.mxu0 0.0
          %1518 = vmatpush1.msra.mxu0 0.0
          %1519 = vmatprep.subr.mxu0 0.0
          %1520 = vmatpush1.msra.mxu0 0.0
          %1521 = vmatprep.subr.mxu0 0.0
          %1522 = vmatpush1.msra.mxu0 0.0
          %1523 = vmatprep.subr.mxu0 0.0
          %1524 = vmatpush1.msra.mxu0 0.0
          %1525 = vmatprep.subr.mxu0 0.0
          %1526 = vmatpush1.msra.mxu0 0.0
          %1527 = vmatprep.mubr.f32.mxu0 0.0
          %1528 = vmatmul.mubr.f32.gmra.mrb[0].mxu0 %v1152
          %v1529 = vpop.f32.mrb[0].mxu0
          %v1530 = vadd.f32 0.0, %v1529
          %v1531 = vpop.f32.mrb[0].mxu0
          %v1532 = vadd.f32 0.0, %v1531
          %1533 = vdwg.mxu0
          %1534 = vmatprep.subr.mxu0 0.0
          %1535 = vmatpush1.msra.mxu0 %v1061
          %1536 = vmatprep.subr.mxu0 0.0
          %1537 = vmatpush1.msra.mxu0 %v1064
          %1538 = vmatprep.subr.mxu0 0.0
          %1539 = vmatpush1.msra.mxu0 %v1067
          %1540 = vmatprep.subr.mxu0 0.0
          %1541 = vmatpush1.msra.mxu0 %v1070
          %1542 = vmatprep.subr.mxu0 0.0
          %1543 = vmatpush1.msra.mxu0 %v1073
          %1544 = vmatprep.subr.mxu0 0.0
          %1545 = vmatpush1.msra.mxu0 %v1076
          %1546 = vmatprep.subr.mxu0 0.0
          %1547 = vmatpush1.msra.mxu0 %v1079
          %1548 = vmatprep.subr.mxu0 0.0
          %1549 = vmatpush1.msra.mxu0 %v1082
          %1550 = vmatprep.subr.mxu0 0.0
          %1551 = vmatpush1.msra.mxu0 %v1085
          %1552 = vmatprep.subr.mxu0 0.0
          %1553 = vmatpush1.msra.mxu0 %v1088
          %1554 = vmatprep.subr.mxu0 0.0
          %1555 = vmatpush1.msra.mxu0 %v1091
          %1556 = vmatprep.subr.mxu0 0.0
          %1557 = vmatpush1.msra.mxu0 %v1094
          %1558 = vmatprep.subr.mxu0 0.0
          %1559 = vmatpush1.msra.mxu0 %v1097
          %1560 = vmatprep.subr.mxu0 0.0
          %1561 = vmatpush1.msra.mxu0 %v1100
          %1562 = vmatprep.subr.mxu0 0.0
          %1563 = vmatpush1.msra.mxu0 %v1103
          %1564 = vmatprep.subr.mxu0 0.0
          %1565 = vmatpush1.msra.mxu0 %v1106
          %1566 = vmatprep.subr.mxu0 0.0
          %1567 = vmatpush1.msra.mxu0 0.0
          %1568 = vmatprep.subr.mxu0 0.0
          %1569 = vmatpush1.msra.mxu0 0.0
          %1570 = vmatprep.subr.mxu0 0.0
          %1571 = vmatpush1.msra.mxu0 0.0
          %1572 = vmatprep.subr.mxu0 0.0
          %1573 = vmatpush1.msra.mxu0 0.0
          %1574 = vmatprep.subr.mxu0 0.0
          %1575 = vmatpush1.msra.mxu0 0.0
          %1576 = vmatprep.subr.mxu0 0.0
          %1577 = vmatpush1.msra.mxu0 0.0
          %1578 = vmatprep.subr.mxu0 0.0
          %1579 = vmatpush1.msra.mxu0 0.0
          %1580 = vmatprep.subr.mxu0 0.0
          %1581 = vmatpush1.msra.mxu0 0.0
          %1582 = vmatprep.subr.mxu0 0.0
          %1583 = vmatpush1.msra.mxu0 0.0
          %1584 = vmatprep.subr.mxu0 0.0
          %1585 = vmatpush1.msra.mxu0 0.0
          %1586 = vmatprep.subr.mxu0 0.0
          %1587 = vmatpush1.msra.mxu0 0.0
          %1588 = vmatprep.subr.mxu0 0.0
          %1589 = vmatpush1.msra.mxu0 0.0
          %1590 = vmatprep.subr.mxu0 0.0
          %1591 = vmatpush1.msra.mxu0 0.0
          %1592 = vmatprep.subr.mxu0 0.0
          %1593 = vmatpush1.msra.mxu0 0.0
          %1594 = vmatprep.subr.mxu0 0.0
          %1595 = vmatpush1.msra.mxu0 0.0
          %1596 = vmatprep.subr.mxu0 0.0
          %1597 = vmatpush1.msra.mxu0 0.0
          %1598 = vmatprep.mubr.f32.mxu0 0.0
          %1599 = vmatmul.mubr.f32.gmra.mrb[0].mxu0 %v1152
          %v1600 = vpop.f32.mrb[0].mxu0
          %v1601 = vadd.f32 0.0, %v1600
          %v1602 = vpop.f32.mrb[0].mxu0
          %1603 = vdwg.mxu0
          %v1604 = vadd.f32 %v1389, %v1530
          %v1605 = vadd.f32 %v1391, %v1532
          %v1606 = vxor.u32 %v1604, 2147483648
          %v1607 = vxor.u32 %v1605, 2147483648
          %v1608 = vmul.f32 %v1606, 1.442695
          %v1609 = vpow.pop %v1608
          %v1610 = vmul.f32 %v1607, 1.442695
          %v1611 = vpow.pop %v1610
          %v1612 = vadd.f32 %v1609, 1.0
          %v1613 = vadd.f32 %v1611, 1.0
          %v1614 = vrcp.pop %v1612
          %v1615 = vmul.f32 1.0, %v1614
          %v1616 = vrcp.pop %v1613
          %v1617 = vmul.f32 1.0, %v1616
          %v1618 = vadd.f32 %v1601, %v1136
          %v1619 = vmul.f32 %v1615, %v1618
          %v1620 = vadd.f32 %v1460, %v1619
          %v1621 = vtanh.pop %v1620
          %v1622 = vsub.f32 1.0, %v1617
          %v1623 = vmul.f32 %v1622, %v1621
          %v1624 = vmul.f32 %v1617, %v1152
          %v1625 = vadd.f32 %v1623, %v1624
          %s1626 = smul.u32 %s1146, 8
          %s1627 = scalar_lea.vmem [#allocation3], %s1626
          %1628 = vst [vmem:[%s1627] sm:$0xff] %v1625
        $region125: #{_sep_impl.1} parent=67 // loop_footer
          %s1148 = sadd.s32 %s1146, 1
        $region126: #{_sep_impl.1} parent=67 // loop_footer_branch
          %1145 = sbr.rel target = $region122
        $region127: #{_sep_impl.1} parent=67 // loop_exit
          _
        %p1629 = scmp.ne.s32.totalorder %s43, 1
        // Predicated region
        $region128: #{_sep_impl.1} parent=67 // pred_check
          %p1630 = pneg %p1629
        $region129: #{_sep_impl.1} parent=67 // pred_check_branch
          %1632 = sbr.rel (%p1630) target = $region131
        $region130: #{_sep_impl.1} parent=67 // pred_region
          %1633 = vst [vmem:[#allocation4] sm:$0xff] %v1151
          %1634 = vst [vmem:[%s1139] sm:$0xff] %v1152
        $region131: #{_sep_impl.1} parent=67 // pred_fallthru
          _
        %p1635 = scmp.eq.s32.totalorder %s43, 1
        // Predicated region
        $region132: #{_sep_impl.1} parent=67 // pred_check
          %p1636 = pneg %p1635
        $region133: #{_sep_impl.1} parent=67 // pred_check_branch
          %1638 = sbr.rel (%p1636) target = $region135
        $region134: #{_sep_impl.1} parent=67 // pred_region
          %1639 = vst [vmem:[#allocation26] sm:$0xff] %v1151
          %s1640 = scalar_lea.vmem [#allocation26], 8
          %1641 = vst [vmem:[%s1640] sm:$0xff] %v1152
        $region135: #{_sep_impl.1} parent=67 // pred_fallthru
          _
        %v1642 = vld [vmem:[#allocation3] sm:$0xff]
        %v1643 = vld [vmem:[#allocation3 + $0x8] sm:$0xff]
        %v1644 = vld [vmem:[#allocation3 + $0x10] sm:$0xff]
        %v1645 = vld [vmem:[#allocation3 + $0x18] sm:$0xff]
        %v1646 = vld [vmem:[#allocation3 + $0x20] sm:$0xff]
        %v1647 = vld [vmem:[#allocation3 + $0x28] sm:$0xff]
        %v1648 = vld [vmem:[#allocation3 + $0x30] sm:$0xff]
        %v1649 = vld [vmem:[#allocation3 + $0x38] sm:$0xff]
        %v1650 = vld [vmem:[#allocation22] sm:$0xff]
        %v1651 = vld [vmem:[#allocation22 + $0x8] sm:$0xff]
        %v1652 = vld [vmem:[#allocation22 + $0x10] sm:$0xff]
        %v1653 = vld [vmem:[#allocation22 + $0x18] sm:$0xff]
        %v1654 = vld [vmem:[#allocation22 + $0x20] sm:$0xff]
        %v1655 = vld [vmem:[#allocation22 + $0x28] sm:$0xff]
        %v1656 = vld [vmem:[#allocation22 + $0x30] sm:$0xff]
        %v1657 = vld [vmem:[#allocation22 + $0x38] sm:$0xff]
        %v1658 = vld [vmem:[#allocation22 + $0x40] sm:$0xff]
        %v1659 = vld [vmem:[#allocation22 + $0x48] sm:$0xff]
        %v1660 = vld [vmem:[#allocation22 + $0x50] sm:$0xff]
        %v1661 = vld [vmem:[#allocation22 + $0x58] sm:$0xff]
        %v1662 = vld [vmem:[#allocation22 + $0x60] sm:$0xff]
        %v1663 = vld [vmem:[#allocation22 + $0x68] sm:$0xff]
        %v1664 = vld [vmem:[#allocation22 + $0x70] sm:$0xff]
        %v1665 = vld [vmem:[#allocation22 + $0x78] sm:$0xff]
        %v1666 = vld [vmem:[#allocation23] sm:$0x1]
        %v1668 = vlaneseq
        %v1669 = vshrl.u32 %v1668, 7
        %v1670 = vsub.s32 0, %v1669
        %v1671 = vrot.slane %v1666, %v1670
        %1673 = vmatprep.subr.mxu0 0.0
        %1674 = vmatpush1.msra.mxu0 %v1650
        %1675 = vmatprep.subr.mxu0 0.0
        %1676 = vmatpush1.msra.mxu0 %v1651
        %1677 = vmatprep.subr.mxu0 0.0
        %1678 = vmatpush1.msra.mxu0 %v1652
        %1679 = vmatprep.subr.mxu0 0.0
        %1680 = vmatpush1.msra.mxu0 %v1653
        %1681 = vmatprep.subr.mxu0 0.0
        %1682 = vmatpush1.msra.mxu0 %v1654
        %1683 = vmatprep.subr.mxu0 0.0
        %1684 = vmatpush1.msra.mxu0 %v1655
        %1685 = vmatprep.subr.mxu0 0.0
        %1686 = vmatpush1.msra.mxu0 %v1656
        %1687 = vmatprep.subr.mxu0 0.0
        %1688 = vmatpush1.msra.mxu0 %v1657
        %1689 = vmatprep.subr.mxu0 0.0
        %1690 = vmatpush1.msra.mxu0 %v1658
        %1691 = vmatprep.subr.mxu0 0.0
        %1692 = vmatpush1.msra.mxu0 %v1659
        %1693 = vmatprep.subr.mxu0 0.0
        %1694 = vmatpush1.msra.mxu0 %v1660
        %1695 = vmatprep.subr.mxu0 0.0
        %1696 = vmatpush1.msra.mxu0 %v1661
        %1697 = vmatprep.subr.mxu0 0.0
        %1698 = vmatpush1.msra.mxu0 %v1662
        %1699 = vmatprep.subr.mxu0 0.0
        %1700 = vmatpush1.msra.mxu0 %v1663
        %1701 = vmatprep.subr.mxu0 0.0
        %1702 = vmatpush1.msra.mxu0 %v1664
        %1703 = vmatprep.subr.mxu0 0.0
        %1704 = vmatpush1.msra.mxu0 %v1665
        %1705 = vmatprep.subr.mxu0 0.0
        %1706 = vmatpush1.msra.mxu0 0.0
        %1707 = vmatprep.subr.mxu0 0.0
        %1708 = vmatpush1.msra.mxu0 0.0
        %1709 = vmatprep.subr.mxu0 0.0
        %1710 = vmatpush1.msra.mxu0 0.0
        %1711 = vmatprep.subr.mxu0 0.0
        %1712 = vmatpush1.msra.mxu0 0.0
        %1713 = vmatprep.subr.mxu0 0.0
        %1714 = vmatpush1.msra.mxu0 0.0
        %1715 = vmatprep.subr.mxu0 0.0
        %1716 = vmatpush1.msra.mxu0 0.0
        %1717 = vmatprep.subr.mxu0 0.0
        %1718 = vmatpush1.msra.mxu0 0.0
        %1719 = vmatprep.subr.mxu0 0.0
        %1720 = vmatpush1.msra.mxu0 0.0
        %1721 = vmatprep.subr.mxu0 0.0
        %1722 = vmatpush1.msra.mxu0 0.0
        %1723 = vmatprep.subr.mxu0 0.0
        %1724 = vmatpush1.msra.mxu0 0.0
        %1725 = vmatprep.subr.mxu0 0.0
        %1726 = vmatpush1.msra.mxu0 0.0
        %1727 = vmatprep.subr.mxu0 0.0
        %1728 = vmatpush1.msra.mxu0 0.0
        %1729 = vmatprep.subr.mxu0 0.0
        %1730 = vmatpush1.msra.mxu0 0.0
        %1731 = vmatprep.subr.mxu0 0.0
        %1732 = vmatpush1.msra.mxu0 0.0
        %1733 = vmatprep.subr.mxu0 0.0
        %1734 = vmatpush1.msra.mxu0 0.0
        %1735 = vmatprep.subr.mxu0 0.0
        %1736 = vmatpush1.msra.mxu0 0.0
        %1737 = vmatprep.mubr.f32.mxu0 0.0
        %1738 = vmatmul.mubr.f32.gmra.mrb[0].mxu0 %v1642
        %v1739 = vpop.f32.mrb[0].mxu0
        %v1740 = vadd.f32 %v1671, %v1739
        %v1741 = vpop.f32.mrb[0].mxu0
        %1742 = vmatprep.mubr.f32.mxu0 0.0
        %1743 = vmatmul.mubr.f32.gmra.mrb[0].mxu0 %v1643
        %v1744 = vpop.f32.mrb[0].mxu0
        %v1745 = vadd.f32 %v1671, %v1744
        %v1746 = vpop.f32.mrb[0].mxu0
        %1747 = vmatprep.mubr.f32.mxu0 0.0
        %1748 = vmatmul.mubr.f32.gmra.mrb[0].mxu0 %v1644
        %v1749 = vpop.f32.mrb[0].mxu0
        %v1750 = vadd.f32 %v1671, %v1749
        %v1751 = vpop.f32.mrb[0].mxu0
        %1752 = vmatprep.mubr.f32.mxu0 0.0
        %1753 = vmatmul.mubr.f32.gmra.mrb[0].mxu0 %v1645
        %v1754 = vpop.f32.mrb[0].mxu0
        %v1755 = vadd.f32 %v1671, %v1754
        %v1756 = vpop.f32.mrb[0].mxu0
        %1757 = vmatprep.mubr.f32.mxu0 0.0
        %1758 = vmatmul.mubr.f32.gmra.mrb[0].mxu0 %v1646
        %v1759 = vpop.f32.mrb[0].mxu0
        %v1760 = vadd.f32 %v1671, %v1759
        %v1761 = vpop.f32.mrb[0].mxu0
        %1762 = vmatprep.mubr.f32.mxu0 0.0
        %1763 = vmatmul.mubr.f32.gmra.mrb[0].mxu0 %v1647
        %v1764 = vpop.f32.mrb[0].mxu0
        %v1765 = vadd.f32 %v1671, %v1764
        %v1766 = vpop.f32.mrb[0].mxu0
        %1767 = vmatprep.mubr.f32.mxu0 0.0
        %1768 = vmatmul.mubr.f32.gmra.mrb[0].mxu0 %v1648
        %v1769 = vpop.f32.mrb[0].mxu0
        %v1770 = vadd.f32 %v1671, %v1769
        %v1771 = vpop.f32.mrb[0].mxu0
        %1772 = vmatprep.mubr.f32.mxu0 0.0
        %1773 = vmatmul.mubr.f32.gmra.mrb[0].mxu0 %v1649
        %v1774 = vpop.f32.mrb[0].mxu0
        %v1775 = vadd.f32 %v1671, %v1774
        %v1776 = vpop.f32.mrb[0].mxu0
        %1777 = vdwg.mxu0
        %v1778 = vxor.u32 %v1740, 2147483648
        %v1779 = vxor.u32 %v1745, 2147483648
        %v1780 = vxor.u32 %v1750, 2147483648
        %v1781 = vxor.u32 %v1755, 2147483648
        %v1782 = vxor.u32 %v1760, 2147483648
        %v1783 = vxor.u32 %v1765, 2147483648
        %v1784 = vxor.u32 %v1770, 2147483648
        %v1785 = vxor.u32 %v1775, 2147483648
        %v1786 = vmul.f32 %v1778, 1.442695
        %v1787 = vpow.pop %v1786
        %v1788 = vmul.f32 %v1779, 1.442695
        %v1789 = vpow.pop %v1788
        %v1790 = vmul.f32 %v1780, 1.442695
        %v1791 = vpow.pop %v1790
        %v1792 = vmul.f32 %v1781, 1.442695
        %v1793 = vpow.pop %v1792
        %v1794 = vmul.f32 %v1782, 1.442695
        %v1795 = vpow.pop %v1794
        %v1796 = vmul.f32 %v1783, 1.442695
        %v1797 = vpow.pop %v1796
        %v1798 = vmul.f32 %v1784, 1.442695
        %v1799 = vpow.pop %v1798
        %v1800 = vmul.f32 %v1785, 1.442695
        %v1801 = vpow.pop %v1800
        %v1802 = vadd.f32 %v1787, 1.0
        %v1803 = vadd.f32 %v1789, 1.0
        %v1804 = vadd.f32 %v1791, 1.0
        %v1805 = vadd.f32 %v1793, 1.0
        %v1806 = vadd.f32 %v1795, 1.0
        %v1807 = vadd.f32 %v1797, 1.0
        %v1808 = vadd.f32 %v1799, 1.0
        %v1809 = vadd.f32 %v1801, 1.0
        %v1810 = vrcp.pop %v1802
        %v1811 = vmul.f32 1.0, %v1810
        %v1812 = vrcp.pop %v1803
        %v1813 = vmul.f32 1.0, %v1812
        %v1814 = vrcp.pop %v1804
        %v1815 = vmul.f32 1.0, %v1814
        %v1816 = vrcp.pop %v1805
        %v1817 = vmul.f32 1.0, %v1816
        %v1818 = vrcp.pop %v1806
        %v1819 = vmul.f32 1.0, %v1818
        %v1820 = vrcp.pop %v1807
        %v1821 = vmul.f32 1.0, %v1820
        %v1822 = vrcp.pop %v1808
        %v1823 = vmul.f32 1.0, %v1822
        %v1824 = vrcp.pop %v1809
        %v1825 = vmul.f32 1.0, %v1824
        %1826 = vst [vmem:[%s635] sm:$0xff] %v1811
        %1827 = vst [vmem:[%s635 + $0x8] sm:$0xff] %v1813
        %1828 = vst [vmem:[%s635 + $0x10] sm:$0xff] %v1815
        %1829 = vst [vmem:[%s635 + $0x18] sm:$0xff] %v1817
        %1830 = vst [vmem:[%s635 + $0x20] sm:$0xff] %v1819
        %1831 = vst [vmem:[%s635 + $0x28] sm:$0xff] %v1821
        %1832 = vst [vmem:[%s635 + $0x30] sm:$0xff] %v1823
        %1833 = vst [vmem:[%s635 + $0x38] sm:$0xff] %v1825
        %s1834 = sand.u32 %s324, 1
        %s1835 = scalar_lea.sflag [#allocation7], %s1834
        %s1836 = sand.u32 %s324, 1
        %s1837 = smul.addr %s1836, 64
        %s1838 = scalar_lea.vmem [#allocation25], %s1837
        // Predicated region
        $region136: #{_sep_impl.1} parent=67 // pred_check
          %p1839 = pneg %p334
        $region137: #{_sep_impl.1} parent=67 // pred_check_branch
          %1841 = sbr.rel (%p1839) target = $region139
        $region138: #{_sep_impl.1} parent=67 // pred_region
          %s1842 = smul.u32 8, %s43
          %s1844 = ssub.s32 1024, 1024
          %1845 = vsyncadd %s1835, %s1844
          %s1846 = smul.addr %s42, 16
          %s1847 = sadd.s32 %s1842, %s1846
          %s1848 = smul.addr %s1847, 128
          %s1849 = scalar_lea.hbm %s12, %s1848
          %s1850 = sshll.u32 %s1838, 4
          %s1851 = int_to_ptr.vmem [resolvable:$true] %s1850
          %1856 = dma.vmem_to_hbm [thread:$0]  %s1851, 1024, %s1849, %s1835, 128, 128, 8
        $region139: #{_sep_impl.1} parent=67 // pred_fallthru
          _
        // Predicated region
        $region140: #{_sep_impl.1} parent=67 // pred_check
          %p1857 = pneg %p360
        $region141: #{_sep_impl.1} parent=67 // pred_check_branch
          %1859 = sbr.rel (%p1857) target = $region143
        $region142: #{_sep_impl.1} parent=67 // pred_region
          %s1861 = ssub.s32 256, 256
          %1862 = vsyncadd [#allocation27], %s1861
          %s1863 = smul.addr %s42, 128
          %s1864 = scalar_lea.hbm %s13, %s1863
          %s1865 = sshll.u32 [#allocation26], 4
          %s1866 = int_to_ptr.vmem [resolvable:$true] %s1865
          %1871 = dma.vmem_to_hbm [thread:$0]  %s1866, 256, %s1864, [#allocation27], 128, 128, 8
        $region143: #{_sep_impl.1} parent=67 // pred_fallthru
          _
        // Predicated region
        $region144: #{_sep_impl.1} parent=67 // pred_check
          %p1872 = pneg %p360
        $region145: #{_sep_impl.1} parent=67 // pred_check_branch
          %1874 = sbr.rel (%p1872) target = $region147
        $region146: #{_sep_impl.1} parent=67 // pred_region
          %1875 = dma.done [#allocation27], 256
        $region147: #{_sep_impl.1} parent=67 // pred_fallthru
          _
      $region68: #{_sep_impl.1} parent=5 // pred_fallthru
        _
      %p1876 = scmp.le.s32.totalorder 2, %s33
      // Predicated region
      $region148: #{_sep_impl.1} parent=5 // pred_check
        %p1877 = pneg %p1876
      $region149: #{_sep_impl.1} parent=5 // pred_check_branch
        %1879 = sbr.rel (%p1877) target = $region151
      $region150: #{_sep_impl.1} parent=5 // pred_region
        %s1880 = ssub.s32 %s33, 2
        // Predicated region
        $region152: #{_sep_impl.1} parent=150 // pred_check
          %p1881 = pneg %p340
        $region153: #{_sep_impl.1} parent=150 // pred_check_branch
          %1883 = sbr.rel (%p1881) target = $region155
        $region154: #{_sep_impl.1} parent=150 // pred_region
          %s1884 = sand.u32 %s325, 1
          %s1885 = scalar_lea.sflag [#allocation7], %s1884
          %s1886 = sand.u32 %s325, 1
          %s1887 = smul.addr %s1886, 64
          %s1888 = scalar_lea.vmem [#allocation25], %s1887
          %1889 = dma.done %s1885, 1024
        $region155: #{_sep_impl.1} parent=150 // pred_fallthru
          _
      $region151: #{_sep_impl.1} parent=5 // pred_fallthru
        _
    $region6: #{_sep_impl.1} parent=1 // loop_footer
      %s37 = sadd.s32 1, %s33
    $region7: #{_sep_impl.1} parent=1 // loop_footer_branch
      %32 = sbr.rel target = $region3
    $region8: #{_sep_impl.1} parent=1 // loop_exit
      _
    %1890 = vsyncpa [#allocation6], 1
    %s1891 = scalar_lea.sflag [#allocation6], 1
    %1892 = vsyncpa %s1891, 1
    %1893 = vsyncpa [#allocation9], 1
    %1894 = vsyncpa [#allocation12], 1
    %1895 = vsyncpa [#allocation15], 1
    %1896 = vsyncpa [#allocation18], 1
    %1897 = vsyncpa [#allocation21], 1
    %1898 = vsyncpa [#allocation24], 1
    %1899 = vsyncpa [#allocation7], 1
    %s1900 = scalar_lea.sflag [#allocation7], 1
    %1901 = vsyncpa %s1900, 1
    %1902 = vsyncpa [#allocation27], 1

</llo_original>
